<compile_context>
chip_gen: v7x
topology: tpu7x:2x2x1
jax: 0.10.0
libtpu: 0.0.40
codegen_flags: <defaults>
</compile_context>

<pallas_src>
import functools

import jax
import jax.numpy as jnp
from jax.experimental import pallas as pl
from jax.experimental.pallas import tpu as pltpu

K1 = 0.01
K2 = 0.03
C1 = (K1 * 1) ** 2
C2 = (K2 * 1) ** 2

_LANE = 128
_SUBLANE = 8


def _ssim_kernel(p_ref, g_ref, loss_ref, psum_ref, *, window_size, n_valid):
    """SSIM loss map for one batch-on-lanes block.

    p_ref, g_ref : VMEM (H, W, L)    float32  (L = lane block, multiple of 128)
    loss_ref     : VMEM (Ho, Wo, L)  float32  (1 - SSIM map, lane-dense store)
    psum_ref     : VMEM (8, L)       float32  (per-lane loss sums, padded lanes = 0)
    """
    H, W, L = p_ref.shape
    Ho = H - window_size + 1
    Wo = W - window_size + 1
    n = float(window_size * window_size)
    inv_n = 1.0 / n
    inv_nm1 = 1.0 / (n - 1.0)

    n_strips = L // _LANE
    lane_base = pl.program_id(0) * L  # global lane offset of this block

    # Static (unrolled) loop over 128-lane strips keeps the per-strip live set
    # small so intermediates stay close to the vreg file instead of bouncing
    # through VMEM for every elementwise op.
    for s in range(n_strips):
        lo = s * _LANE
        p = p_ref[:, :, lo:lo + _LANE]
        g = g_ref[:, :, lo:lo + _LANE]

        # Fused horizontal (sublane-dim) pass: shift p and g once per dx and
        # form the products from the shifted values; accumulate all 5 box
        # sums in one sweep (no full-size p*p / g*g / p*g temporaries).
        sp = sg = spp = sgg = spg = None
        for dx in range(window_size):
            ps = p[:, dx:dx + Wo, :]
            gs = g[:, dx:dx + Wo, :]
            if dx == 0:
                sp, sg = ps, gs
                spp, sgg, spg = ps * ps, gs * gs, ps * gs
            else:
                sp = sp + ps
                sg = sg + gs
                spp = spp + ps * ps
                sgg = sgg + gs * gs
                spg = spg + ps * gs

        # Vertical (major-dim) pass: plain row-offset adds, no cross-lane work.
        def vsum(x):
            v = x[0:Ho]
            for dy in range(1, window_size):
                v = v + x[dy:dy + Ho]
            return v

        mu_p = vsum(sp) * inv_n
        mu_g = vsum(sg) * inv_n
        var_p = vsum(spp) * inv_nm1 - mu_p * mu_p
        var_g = vsum(sgg) * inv_nm1 - mu_g * mu_g
        cov = vsum(spg) * inv_nm1 - mu_p * mu_g

        num = (2.0 * mu_p * mu_g + C1) * (2.0 * cov + C2)
        den = (mu_p * mu_p + mu_g * mu_g + C1) * (var_p + var_g + C2)

        # Divide -> EUP reciprocal + one Newton step (keeps ~1e-7 rel. error).
        inv_den = pl.reciprocal(den, approx=True)
        inv_den = inv_den * (2.0 - den * inv_den)
        loss = 1.0 - num * inv_den

        loss_ref[:, :, lo:lo + _LANE] = loss

        # Per-lane partial sums so the wrapper mean does not re-read the map.
        col = jnp.sum(loss, axis=0)                       # (Wo, 128)
        lane_sums = jnp.sum(col, axis=0, keepdims=True)   # (1, 128)
        lane_sums = jnp.broadcast_to(lane_sums, (_SUBLANE, _LANE))
        lane_idx = (jax.lax.broadcasted_iota(jnp.int32, (_SUBLANE, _LANE), 1)
                    + lane_base + lo)
        psum_ref[:, lo:lo + _LANE] = jnp.where(lane_idx < n_valid,
                                               lane_sums, 0.0)


def ssim_loss(prediction, ground_truth, window_size=3):
    """JAX/Pallas equivalent of SSIMLoss.forward (use_all=True path).

    prediction, ground_truth: (N, 1, H, W) float32 (NCHW, single channel).
    Returns (mean(1 - SSIM_map), (N, 1, Ho, Wo) loss map).
    """
    N, C, H, W = prediction.shape
    assert C == 1, "SSIMLoss's ones_filter is (1,1,w,w): single-channel input"
    Ho = H - window_size + 1
    Wo = W - window_size + 1

    # Generation-aware VMEM budget (v7x has 64 MiB vs 128 MiB on v5e/v6e).
    try:
        vmem_cap = int(pltpu.get_tpu_info().vmem_capacity_bytes)
    except Exception:  # fall back to the most conservative generation
        vmem_cap = 64 * 1024 * 1024

    plane_bytes = H * W * 4
    target_block_bytes = min(vmem_cap // 16, 2 << 20)
    target_lanes = max(
        _LANE,
        min(1024, (target_block_bytes // plane_bytes) // _LANE * _LANE))

    # Lane-block sizing: multiple of 128, capped so the grid keeps >= ~4 steps
    # whenever the batch allows it (DMA/compute overlap + v7x megacore split).
    Nmin = pl.cdiv(N, _LANE) * _LANE
    pipeline_cap = max(_LANE, (Nmin // 4) // _LANE * _LANE)
    lane_block = max(_LANE, min(target_lanes, pipeline_cap))
    n_blocks = pl.cdiv(Nmin, lane_block)
    Npad = n_blocks * lane_block

    # Batch-on-lanes relayout (wrapper-side layout plumbing): (N,1,H,W) ->
    # (H, W, Npad).  Zero-padded lanes are masked in the kernel's partial
    # sums and sliced away from the returned map below.
    def relayout(x):
        x = x.reshape(N, H, W).astype(jnp.float32)
        x = jnp.transpose(x, (1, 2, 0))  # (H, W, N)
        return jnp.pad(x, ((0, 0), (0, 0), (0, Npad - N)))

    p_t = relayout(prediction)
    g_t = relayout(ground_truth)

    kernel = functools.partial(_ssim_kernel, window_size=window_size, n_valid=N)

    block_bytes = H * W * lane_block * 4
    vmem_limit = int(min(vmem_cap * 3 // 4,
                         max(8 * 1024 * 1024, 12 * block_bytes)))

    # TODO(synk): for very large H, W also tile spatially with a
    # (window_size-1) halo on H via the index_map to bound the VMEM live set.
    loss_t, psums = pl.pallas_call(
        kernel,
        out_shape=(jax.ShapeDtypeStruct((Ho, Wo, Npad), jnp.float32),
                   jax.ShapeDtypeStruct((_SUBLANE, Npad), jnp.float32)),
        grid_spec=pltpu.PrefetchScalarGridSpec(
            num_scalar_prefetch=0,
            grid=(n_blocks,),
            in_specs=[
                pl.BlockSpec((H, W, lane_block), lambda b: (0, 0, b)),
                pl.BlockSpec((H, W, lane_block), lambda b: (0, 0, b)),
            ],
            out_specs=[
                pl.BlockSpec((Ho, Wo, lane_block), lambda b: (0, 0, b)),
                pl.BlockSpec((_SUBLANE, lane_block), lambda b: (0, b)),
            ],
        ),
        compiler_params=pltpu.CompilerParams(
            dimension_semantics=("parallel",),
            vmem_limit_bytes=vmem_limit),
    )(p_t, g_t)

    # Mean from the tiny per-lane partial sums (padded lanes already zeroed).
    mean_loss = jnp.sum(psums[0, :]) / float(N * Ho * Wo)

    # Back to NCHW, drop padded lanes.
    # TODO(synk): consumers that accept the (Ho, Wo, N) layout can skip this
    # transpose and save an HBM round trip.
    loss_map = jnp.transpose(loss_t[:, :, :N], (2, 0, 1)).reshape(N, 1, Ho, Wo)
    return mean_loss, loss_map


def _ssim_loss_ref(prediction, ground_truth, window_size=3):
    """Pure-JAX reference mirroring the PyTorch math."""
    N, C, H, W = prediction.shape
    Ho = H - window_size + 1
    Wo = W - window_size + 1
    n = float(window_size * window_size)

    def box_sum(x):  # x: (N, 1, H, W)
        acc = jnp.zeros((N, C, Ho, Wo), jnp.float32)
        for dy in range(window_size):
            for dx in range(window_size):
                acc = acc + x[:, :, dy:dy + Ho, dx:dx + Wo]
        return acc

    p = prediction.astype(jnp.float32)
    g = ground_truth.astype(jnp.float32)
    mu_p = box_sum(p) / n
    mu_g = box_sum(g) / n
    var_p = box_sum(p * p) / (n - 1.0) - mu_p ** 2
    var_g = box_sum(g * g) / (n - 1.0) - mu_g ** 2
    cov = box_sum(p * g) / (n - 1.0) - mu_p * mu_g
    ssim = ((2.0 * mu_p * mu_g + C1) * (2.0 * cov + C2)
            / ((mu_p ** 2 + mu_g ** 2 + C1) * (var_p + var_g + C2)))
    return jnp.mean(1.0 - ssim), 1.0 - ssim


if __name__ == "__main__":
    key = jax.random.PRNGKey(0)
    kp, kg = jax.random.split(key)
    B, Cc, H, W = 2, 1, 16, 16  # single channel, per the (1,1,w,w) ones_filter
    prediction = jax.random.uniform(kp, (B, Cc, H, W), dtype=jnp.float32)
    ground_truth = jax.random.uniform(kg, (B, Cc, H, W), dtype=jnp.float32)

    mean_loss, loss_map = ssim_loss(prediction, ground_truth, window_size=3)
    mean_loss = jax.block_until_ready(mean_loss)
    loss_map = jax.block_until_ready(loss_map)

    ref_mean, ref_map = _ssim_loss_ref(prediction, ground_truth, window_size=3)
    assert loss_map.shape == (B, 1, H - 2, W - 2)
    assert jnp.allclose(loss_map, ref_map, rtol=1e-5, atol=1e-5)
    assert jnp.allclose(mean_loss, ref_mean, rtol=1e-5, atol=1e-5)

    print("KERNEL_OK")
</pallas_src>

<mosaic_0001>
module attributes {stable_mosaic.version = 11 : i64} {
  func.func @_ssim_kernel(%arg0: i32, %arg1: memref<16x16x128xf32, #tpu.memory_space<vmem>>, %arg2: memref<16x16x128xf32, #tpu.memory_space<vmem>>, %arg3: memref<14x14x128xf32, #tpu.memory_space<vmem>>, %arg4: memref<8x128xf32, #tpu.memory_space<vmem>>) attributes {dimension_semantics = [#tpu.dimension_semantics<parallel>], iteration_bounds = array<i64: 1>, scalar_prefetch = 0 : i64, scratch_operands = 0 : i64, tpu.core_type = #tpu.core_type<tc>, window_params = [{transform_indices = @transform_0, window_bounds = array<i64: 16, 16, 128>}, {transform_indices = @transform_1, window_bounds = array<i64: 16, 16, 128>}, {transform_indices = @transform_2, window_bounds = array<i64: 14, 14, 128>}, {transform_indices = @transform_3, window_bounds = array<i64: 8, 128>}]} {
    %c128_i32 = arith.constant 128 : i32
    %0 = arith.muli %arg0, %c128_i32 : i32
    %c0 = arith.constant 0 : index
    %c0_0 = arith.constant 0 : index
    %c0_1 = arith.constant 0 : index
    %1 = vector.load %arg1[%c0, %c0_0, %c0_1] : memref<16x16x128xf32, #tpu.memory_space<vmem>>, vector<16x16x128xf32>
    %c0_2 = arith.constant 0 : index
    %c0_3 = arith.constant 0 : index
    %c0_4 = arith.constant 0 : index
    %2 = vector.load %arg2[%c0_2, %c0_3, %c0_4] : memref<16x16x128xf32, #tpu.memory_space<vmem>>, vector<16x16x128xf32>
    %3 = vector.extract_strided_slice %1 {offsets = [0, 0, 0], sizes = [16, 14, 128], strides = [1, 1, 1]} : vector<16x16x128xf32> to vector<16x14x128xf32>
    %4 = vector.extract_strided_slice %2 {offsets = [0, 0, 0], sizes = [16, 14, 128], strides = [1, 1, 1]} : vector<16x16x128xf32> to vector<16x14x128xf32>
    %5 = arith.mulf %3, %3 : vector<16x14x128xf32>
    %6 = arith.mulf %4, %4 : vector<16x14x128xf32>
    %7 = arith.mulf %3, %4 : vector<16x14x128xf32>
    %8 = vector.extract_strided_slice %1 {offsets = [0, 1, 0], sizes = [16, 14, 128], strides = [1, 1, 1]} : vector<16x16x128xf32> to vector<16x14x128xf32>
    %9 = vector.extract_strided_slice %2 {offsets = [0, 1, 0], sizes = [16, 14, 128], strides = [1, 1, 1]} : vector<16x16x128xf32> to vector<16x14x128xf32>
    %10 = arith.addf %3, %8 : vector<16x14x128xf32>
    %11 = arith.addf %4, %9 : vector<16x14x128xf32>
    %12 = arith.mulf %8, %8 : vector<16x14x128xf32>
    %13 = arith.addf %5, %12 : vector<16x14x128xf32>
    %14 = arith.mulf %9, %9 : vector<16x14x128xf32>
    %15 = arith.addf %6, %14 : vector<16x14x128xf32>
    %16 = arith.mulf %8, %9 : vector<16x14x128xf32>
    %17 = arith.addf %7, %16 : vector<16x14x128xf32>
    %18 = vector.extract_strided_slice %1 {offsets = [0, 2, 0], sizes = [16, 14, 128], strides = [1, 1, 1]} : vector<16x16x128xf32> to vector<16x14x128xf32>
    %19 = vector.extract_strided_slice %2 {offsets = [0, 2, 0], sizes = [16, 14, 128], strides = [1, 1, 1]} : vector<16x16x128xf32> to vector<16x14x128xf32>
    %20 = arith.addf %10, %18 : vector<16x14x128xf32>
    %21 = arith.addf %11, %19 : vector<16x14x128xf32>
    %22 = arith.mulf %18, %18 : vector<16x14x128xf32>
    %23 = arith.addf %13, %22 : vector<16x14x128xf32>
    %24 = arith.mulf %19, %19 : vector<16x14x128xf32>
    %25 = arith.addf %15, %24 : vector<16x14x128xf32>
    %26 = arith.mulf %18, %19 : vector<16x14x128xf32>
    %27 = arith.addf %17, %26 : vector<16x14x128xf32>
    %28 = vector.extract_strided_slice %20 {offsets = [0, 0, 0], sizes = [14, 14, 128], strides = [1, 1, 1]} : vector<16x14x128xf32> to vector<14x14x128xf32>
    %29 = vector.extract_strided_slice %20 {offsets = [1, 0, 0], sizes = [14, 14, 128], strides = [1, 1, 1]} : vector<16x14x128xf32> to vector<14x14x128xf32>
    %30 = arith.addf %28, %29 : vector<14x14x128xf32>
    %31 = vector.extract_strided_slice %20 {offsets = [2, 0, 0], sizes = [14, 14, 128], strides = [1, 1, 1]} : vector<16x14x128xf32> to vector<14x14x128xf32>
    %32 = arith.addf %30, %31 : vector<14x14x128xf32>
    %cst = arith.constant 0.111111112 : f32
    %33 = vector.broadcast %cst : f32 to vector<14x14x128xf32>
    %34 = arith.mulf %32, %33 : vector<14x14x128xf32>
    %35 = vector.extract_strided_slice %21 {offsets = [0, 0, 0], sizes = [14, 14, 128], strides = [1, 1, 1]} : vector<16x14x128xf32> to vector<14x14x128xf32>
    %36 = vector.extract_strided_slice %21 {offsets = [1, 0, 0], sizes = [14, 14, 128], strides = [1, 1, 1]} : vector<16x14x128xf32> to vector<14x14x128xf32>
    %37 = arith.addf %35, %36 : vector<14x14x128xf32>
    %38 = vector.extract_strided_slice %21 {offsets = [2, 0, 0], sizes = [14, 14, 128], strides = [1, 1, 1]} : vector<16x14x128xf32> to vector<14x14x128xf32>
    %39 = arith.addf %37, %38 : vector<14x14x128xf32>
    %cst_5 = arith.constant 0.111111112 : f32
    %40 = vector.broadcast %cst_5 : f32 to vector<14x14x128xf32>
    %41 = arith.mulf %39, %40 : vector<14x14x128xf32>
    %42 = vector.extract_strided_slice %23 {offsets = [0, 0, 0], sizes = [14, 14, 128], strides = [1, 1, 1]} : vector<16x14x128xf32> to vector<14x14x128xf32>
    %43 = vector.extract_strided_slice %23 {offsets = [1, 0, 0], sizes = [14, 14, 128], strides = [1, 1, 1]} : vector<16x14x128xf32> to vector<14x14x128xf32>
    %44 = arith.addf %42, %43 : vector<14x14x128xf32>
    %45 = vector.extract_strided_slice %23 {offsets = [2, 0, 0], sizes = [14, 14, 128], strides = [1, 1, 1]} : vector<16x14x128xf32> to vector<14x14x128xf32>
    %46 = arith.addf %44, %45 : vector<14x14x128xf32>
    %cst_6 = arith.constant 1.250000e-01 : f32
    %47 = vector.broadcast %cst_6 : f32 to vector<14x14x128xf32>
    %48 = arith.mulf %46, %47 : vector<14x14x128xf32>
    %49 = arith.mulf %34, %34 : vector<14x14x128xf32>
    %50 = arith.subf %48, %49 : vector<14x14x128xf32>
    %51 = vector.extract_strided_slice %25 {offsets = [0, 0, 0], sizes = [14, 14, 128], strides = [1, 1, 1]} : vector<16x14x128xf32> to vector<14x14x128xf32>
    %52 = vector.extract_strided_slice %25 {offsets = [1, 0, 0], sizes = [14, 14, 128], strides = [1, 1, 1]} : vector<16x14x128xf32> to vector<14x14x128xf32>
    %53 = arith.addf %51, %52 : vector<14x14x128xf32>
    %54 = vector.extract_strided_slice %25 {offsets = [2, 0, 0], sizes = [14, 14, 128], strides = [1, 1, 1]} : vector<16x14x128xf32> to vector<14x14x128xf32>
    %55 = arith.addf %53, %54 : vector<14x14x128xf32>
    %cst_7 = arith.constant 1.250000e-01 : f32
    %56 = vector.broadcast %cst_7 : f32 to vector<14x14x128xf32>
    %57 = arith.mulf %55, %56 : vector<14x14x128xf32>
    %58 = arith.mulf %41, %41 : vector<14x14x128xf32>
    %59 = arith.subf %57, %58 : vector<14x14x128xf32>
    %60 = vector.extract_strided_slice %27 {offsets = [0, 0, 0], sizes = [14, 14, 128], strides = [1, 1, 1]} : vector<16x14x128xf32> to vector<14x14x128xf32>
    %61 = vector.extract_strided_slice %27 {offsets = [1, 0, 0], sizes = [14, 14, 128], strides = [1, 1, 1]} : vector<16x14x128xf32> to vector<14x14x128xf32>
    %62 = arith.addf %60, %61 : vector<14x14x128xf32>
    %63 = vector.extract_strided_slice %27 {offsets = [2, 0, 0], sizes = [14, 14, 128], strides = [1, 1, 1]} : vector<16x14x128xf32> to vector<14x14x128xf32>
    %64 = arith.addf %62, %63 : vector<14x14x128xf32>
    %cst_8 = arith.constant 1.250000e-01 : f32
    %65 = vector.broadcast %cst_8 : f32 to vector<14x14x128xf32>
    %66 = arith.mulf %64, %65 : vector<14x14x128xf32>
    %67 = arith.mulf %34, %41 : vector<14x14x128xf32>
    %68 = arith.subf %66, %67 : vector<14x14x128xf32>
    %cst_9 = arith.constant 2.000000e+00 : f32
    %69 = vector.broadcast %cst_9 : f32 to vector<14x14x128xf32>
    %70 = arith.mulf %69, %34 : vector<14x14x128xf32>
    %71 = arith.mulf %70, %41 : vector<14x14x128xf32>
    %cst_10 = arith.constant 9.99999974E-5 : f32
    %72 = vector.broadcast %cst_10 : f32 to vector<14x14x128xf32>
    %73 = arith.addf %71, %72 : vector<14x14x128xf32>
    %cst_11 = arith.constant 2.000000e+00 : f32
    %74 = vector.broadcast %cst_11 : f32 to vector<14x14x128xf32>
    %75 = arith.mulf %74, %68 : vector<14x14x128xf32>
    %cst_12 = arith.constant 8.99999984E-4 : f32
    %76 = vector.broadcast %cst_12 : f32 to vector<14x14x128xf32>
    %77 = arith.addf %75, %76 : vector<14x14x128xf32>
    %78 = arith.mulf %73, %77 : vector<14x14x128xf32>
    %79 = arith.mulf %34, %34 : vector<14x14x128xf32>
    %80 = arith.mulf %41, %41 : vector<14x14x128xf32>
    %81 = arith.addf %79, %80 : vector<14x14x128xf32>
    %cst_13 = arith.constant 9.99999974E-5 : f32
    %82 = vector.broadcast %cst_13 : f32 to vector<14x14x128xf32>
    %83 = arith.addf %81, %82 : vector<14x14x128xf32>
    %84 = arith.addf %50, %59 : vector<14x14x128xf32>
    %cst_14 = arith.constant 8.99999984E-4 : f32
    %85 = vector.broadcast %cst_14 : f32 to vector<14x14x128xf32>
    %86 = arith.addf %84, %85 : vector<14x14x128xf32>
    %87 = arith.mulf %83, %86 : vector<14x14x128xf32>
    %88 = tpu.reciprocal %87 {approx = true} : vector<14x14x128xf32> -> vector<14x14x128xf32>
    %89 = arith.mulf %87, %88 : vector<14x14x128xf32>
    %cst_15 = arith.constant 2.000000e+00 : f32
    %90 = vector.broadcast %cst_15 : f32 to vector<14x14x128xf32>
    %91 = arith.subf %90, %89 : vector<14x14x128xf32>
    %92 = arith.mulf %88, %91 : vector<14x14x128xf32>
    %93 = arith.mulf %78, %92 : vector<14x14x128xf32>
    %cst_16 = arith.constant 1.000000e+00 : f32
    %94 = vector.broadcast %cst_16 : f32 to vector<14x14x128xf32>
    %95 = arith.subf %94, %93 : vector<14x14x128xf32>
    %c0_17 = arith.constant 0 : index
    %c0_18 = arith.constant 0 : index
    %c0_19 = arith.constant 0 : index
    %96 = vector.load %arg3[%c0_17, %c0_18, %c0_19] : memref<14x14x128xf32, #tpu.memory_space<vmem>>, vector<14x14x128xf32>
    tpu.vector_store %arg3[%c0_17, %c0_18, %c0_19], %95 {strides = array<i32>} : memref<14x14x128xf32, #tpu.memory_space<vmem>>, vector<14x14x128xf32>,
    %cst_20 = arith.constant dense<0.000000e+00> : vector<14x128xf32>
    %97 = vector.multi_reduction <add>, %95, %cst_20 [0] : vector<14x14x128xf32> to vector<14x128xf32>
    %cst_21 = arith.constant dense<0.000000e+00> : vector<128xf32>
    %98 = vector.multi_reduction <add>, %97, %cst_21 [0] : vector<14x128xf32> to vector<128xf32>
    %99 = vector.shape_cast %98 : vector<128xf32> to vector<1x128xf32>
    %100 = vector.shape_cast %99 : vector<1x128xf32> to vector<1x128xf32>
    %101 = vector.broadcast %100 : vector<1x128xf32> to vector<8x128xf32>
    %102 = tpu.iota {dimensions = array<i32: 1>} : vector<8x128xi32>
    %103 = vector.broadcast %0 : i32 to vector<8x128xi32>
    %104 = arith.addi %102, %103 : vector<8x128xi32>
    %c0_i32 = arith.constant 0 : i32
    %105 = vector.broadcast %c0_i32 : i32 to vector<8x128xi32>
    %106 = arith.addi %104, %105 : vector<8x128xi32>
    %c2_i32 = arith.constant 2 : i32
    %107 = vector.broadcast %c2_i32 : i32 to vector<8x128xi32>
    %108 = arith.cmpi slt, %106, %107 : vector<8x128xi32>
    %cst_22 = arith.constant 0.000000e+00 : f32
    %109 = vector.broadcast %cst_22 : f32 to vector<8x128xf32>
    %110 = arith.select %108, %101, %109 : vector<8x128xi1>, vector<8x128xf32>
    %c0_23 = arith.constant 0 : index
    %c0_24 = arith.constant 0 : index
    %111 = vector.load %arg4[%c0_23, %c0_24] : memref<8x128xf32, #tpu.memory_space<vmem>>, vector<8x128xf32>
    tpu.vector_store %arg4[%c0_23, %c0_24], %110 {strides = array<i32>} : memref<8x128xf32, #tpu.memory_space<vmem>>, vector<8x128xf32>,
    return
  }
  func.func @transform_0(%arg0: i32) -> (i32, i32, i32) {
    %c0_i32 = arith.constant 0 : i32
    %c0_i32_0 = arith.constant 0 : i32
    %c0_i32_1 = arith.constant 0 : i32
    return %c0_i32, %c0_i32_0, %arg0 : i32, i32, i32
  }
  func.func @transform_1(%arg0: i32) -> (i32, i32, i32) {
    %c0_i32 = arith.constant 0 : i32
    %c0_i32_0 = arith.constant 0 : i32
    %c0_i32_1 = arith.constant 0 : i32
    return %c0_i32, %c0_i32_0, %arg0 : i32, i32, i32
  }
  func.func @transform_2(%arg0: i32) -> (i32, i32, i32) {
    %c0_i32 = arith.constant 0 : i32
    %c0_i32_0 = arith.constant 0 : i32
    %c0_i32_1 = arith.constant 0 : i32
    return %c0_i32, %c0_i32_0, %arg0 : i32, i32, i32
  }
  func.func @transform_3(%arg0: i32) -> (i32, i32) {
    %c0_i32 = arith.constant 0 : i32
    %c0_i32_0 = arith.constant 0 : i32
    return %c0_i32, %arg0 : i32, i32
  }
}

</mosaic_0001>

<llo_original>
// kernel: tpu_custom_call.1
$region0: #{tpu_custom_call.1}
  #allocation0 [shape = 'u32[]', space=smem, size = 0x4, offset = 0x4, fixed_abs, tag = 'smem constant byte address 0x4 - core index']
  #allocation1 [shape = 'u32[144,128]{1,0:T(1,128)}', space=vmem, size = 0x12000, scoped, tag = 'internal scratch']
  %s0 = inlined_call_operand.hbm [shape: f32[16,16,128], index: 0, kind: input, shape index: {}]
  %s1 = inlined_call_operand.hbm [shape: f32[16,16,128], index: 1, kind: input, shape index: {}]
  %s2 = inlined_call_operand.hbm [shape: f32[14,14,128], index: 2, kind: output, shape index: {0}]
  %s3 = inlined_call_operand.hbm [shape: f32[8,128], index: 3, kind: output, shape index: {1}]
  %4 = xla_tuple %s2, %s3
  %s5 = sld [smem:[#allocation0]]
  $region34: #{tpu_custom_call.1} parent=0
    _
  %s7 = ssub.s32 1, %s5
  %s8 = scalar_select 0, %s7, %s5
  $region1: #{tpu_custom_call.1} parent=0
    #allocation2 [shape = 'u8[131072]{0}', space=vmem, size = 0x20000, scoped, tag = 'input window, operand 0, single buffered']
    #allocation3 [shape = 's32[1]{0}', space=sflag, size = 0x4, scoped, tag = 'scoped memory for tpu_custom_call.1']
    #allocation4 [shape = 's32[1]{0}', space=sflag, size = 0x4, scoped, tag = 'scoped memory for tpu_custom_call.1']
    #allocation5 [shape = 'u8[131072]{0}', space=vmem, size = 0x20000, scoped, tag = 'input window, operand 1, single buffered']
    #allocation6 [shape = 's32[1]{0}', space=sflag, size = 0x4, scoped, tag = 'scoped memory for tpu_custom_call.1']
    #allocation7 [shape = 'u8[114688]{0}', space=vmem, size = 0x1c000, scoped, tag = 'output window, operand 0, single buffered']
    #allocation8 [shape = 'u8[4096]{0}', space=vmem, size = 0x1000, scoped, tag = 'output window, operand 1, single buffered']
    #allocation9 [shape = 's32[1]{0}', space=sflag, size = 0x4, scoped, tag = 'scoped memory for tpu_custom_call.1']
    %9 = vsyncpa [#allocation3], 0
    %10 = vsyncpa [#allocation6], 0
    %11 = vsyncpa [#allocation4], 0
    %12 = vsyncpa [#allocation9], 0
    // Predicated region
    $region2: #{tpu_custom_call.1} parent=1 // pred_check
      _
    $region3: #{tpu_custom_call.1} parent=1 // pred_check_branch
      %14 = sbr.rel (0) target = $region5
    $region4: #{tpu_custom_call.1} parent=1 // pred_region
      %s16 = ssub.s32 4096, 4096
      %17 = vsyncadd [#allocation3], %s16
      %s18 = sshll.u32 [#allocation2], 4
      %s19 = int_to_ptr.vmem [resolvable:$true] %s18
      %24 = dma.hbm_to_vmem [thread:$0]  %s0, 4096, %s19, [#allocation3], 128, 128, 8
    $region5: #{tpu_custom_call.1} parent=1 // pred_fallthru
      _
    // Predicated region
    $region6: #{tpu_custom_call.1} parent=1 // pred_check
      _
    $region7: #{tpu_custom_call.1} parent=1 // pred_check_branch
      %26 = sbr.rel (0) target = $region9
    $region8: #{tpu_custom_call.1} parent=1 // pred_region
      %s28 = ssub.s32 4096, 4096
      %29 = vsyncadd [#allocation6], %s28
      %s30 = sshll.u32 [#allocation5], 4
      %s31 = int_to_ptr.vmem [resolvable:$true] %s30
      %36 = dma.hbm_to_vmem [thread:$0]  %s1, 4096, %s31, [#allocation6], 128, 128, 8
    $region9: #{tpu_custom_call.1} parent=1 // pred_fallthru
      _
    // Predicated region
    $region10: #{tpu_custom_call.1} parent=1 // pred_check
      _
    $region11: #{tpu_custom_call.1} parent=1 // pred_check_branch
      %38 = sbr.rel (0) target = $region13
    $region12: #{tpu_custom_call.1} parent=1 // pred_region
      %39 = dma.done [#allocation3], 4096
    $region13: #{tpu_custom_call.1} parent=1 // pred_fallthru
      _
    // Predicated region
    $region14: #{tpu_custom_call.1} parent=1 // pred_check
      _
    $region15: #{tpu_custom_call.1} parent=1 // pred_check_branch
      %41 = sbr.rel (0) target = $region17
    $region16: #{tpu_custom_call.1} parent=1 // pred_region
      %42 = dma.done [#allocation6], 4096
    $region17: #{tpu_custom_call.1} parent=1 // pred_fallthru
      _
    %s43 = smul.u32 0, 128
    %v44 = vld [vmem:[#allocation2] sm:$0xff]
    %v45 = vld [vmem:[#allocation2 + $0x8] sm:$0xff]
    %v46 = vld [vmem:[#allocation2 + $0x10] sm:$0xff]
    %v47 = vld [vmem:[#allocation2 + $0x18] sm:$0xff]
    %v48 = vld [vmem:[#allocation2 + $0x20] sm:$0xff]
    %v49 = vld [vmem:[#allocation2 + $0x28] sm:$0xff]
    %v50 = vld [vmem:[#allocation2 + $0x30] sm:$0xff]
    %v51 = vld [vmem:[#allocation2 + $0x38] sm:$0xff]
    %v52 = vld [vmem:[#allocation2 + $0x40] sm:$0xff]
    %v53 = vld [vmem:[#allocation2 + $0x48] sm:$0xff]
    %v54 = vld [vmem:[#allocation2 + $0x50] sm:$0xff]
    %v55 = vld [vmem:[#allocation2 + $0x58] sm:$0xff]
    %v56 = vld [vmem:[#allocation2 + $0x60] sm:$0xff]
    %v57 = vld [vmem:[#allocation2 + $0x68] sm:$0xff]
    %v58 = vld [vmem:[#allocation2 + $0x70] sm:$0xff]
    %v59 = vld [vmem:[#allocation2 + $0x78] sm:$0xff]
    %v60 = vld [vmem:[#allocation2 + $0x80] sm:$0xff]
    %v61 = vld [vmem:[#allocation2 + $0x88] sm:$0xff]
    %v62 = vld [vmem:[#allocation2 + $0x90] sm:$0xff]
    %v63 = vld [vmem:[#allocation2 + $0x98] sm:$0xff]
    %v64 = vld [vmem:[#allocation2 + $0xa0] sm:$0xff]
    %v65 = vld [vmem:[#allocation2 + $0xa8] sm:$0xff]
    %v66 = vld [vmem:[#allocation2 + $0xb0] sm:$0xff]
    %v67 = vld [vmem:[#allocation2 + $0xb8] sm:$0xff]
    %v68 = vld [vmem:[#allocation2 + $0xc0] sm:$0xff]
    %v69 = vld [vmem:[#allocation2 + $0xc8] sm:$0xff]
    %v70 = vld [vmem:[#allocation2 + $0xd0] sm:$0xff]
    %v71 = vld [vmem:[#allocation2 + $0xd8] sm:$0xff]
    %v72 = vld [vmem:[#allocation2 + $0xe0] sm:$0xff]
    %v73 = vld [vmem:[#allocation2 + $0xe8] sm:$0xff]
    %v74 = vld [vmem:[#allocation2 + $0xf0] sm:$0xff]
    %v75 = vld [vmem:[#allocation2 + $0xf8] sm:$0xff]
    %v76 = vld [vmem:[#allocation5] sm:$0xff]
    %v77 = vld [vmem:[#allocation5 + $0x8] sm:$0xff]
    %v78 = vld [vmem:[#allocation5 + $0x10] sm:$0xff]
    %v79 = vld [vmem:[#allocation5 + $0x18] sm:$0xff]
    %v80 = vld [vmem:[#allocation5 + $0x20] sm:$0xff]
    %v81 = vld [vmem:[#allocation5 + $0x28] sm:$0xff]
    %v82 = vld [vmem:[#allocation5 + $0x30] sm:$0xff]
    %v83 = vld [vmem:[#allocation5 + $0x38] sm:$0xff]
    %v84 = vld [vmem:[#allocation5 + $0x40] sm:$0xff]
    %v85 = vld [vmem:[#allocation5 + $0x48] sm:$0xff]
    %v86 = vld [vmem:[#allocation5 + $0x50] sm:$0xff]
    %v87 = vld [vmem:[#allocation5 + $0x58] sm:$0xff]
    %v88 = vld [vmem:[#allocation5 + $0x60] sm:$0xff]
    %v89 = vld [vmem:[#allocation5 + $0x68] sm:$0xff]
    %v90 = vld [vmem:[#allocation5 + $0x70] sm:$0xff]
    %v91 = vld [vmem:[#allocation5 + $0x78] sm:$0xff]
    %v92 = vld [vmem:[#allocation5 + $0x80] sm:$0xff]
    %v93 = vld [vmem:[#allocation5 + $0x88] sm:$0xff]
    %v94 = vld [vmem:[#allocation5 + $0x90] sm:$0xff]
    %v95 = vld [vmem:[#allocation5 + $0x98] sm:$0xff]
    %v96 = vld [vmem:[#allocation5 + $0xa0] sm:$0xff]
    %v97 = vld [vmem:[#allocation5 + $0xa8] sm:$0xff]
    %v98 = vld [vmem:[#allocation5 + $0xb0] sm:$0xff]
    %v99 = vld [vmem:[#allocation5 + $0xb8] sm:$0xff]
    %v100 = vld [vmem:[#allocation5 + $0xc0] sm:$0xff]
    %v101 = vld [vmem:[#allocation5 + $0xc8] sm:$0xff]
    %v102 = vld [vmem:[#allocation5 + $0xd0] sm:$0xff]
    %v103 = vld [vmem:[#allocation5 + $0xd8] sm:$0xff]
    %v104 = vld [vmem:[#allocation5 + $0xe0] sm:$0xff]
    %v105 = vld [vmem:[#allocation5 + $0xe8] sm:$0xff]
    %v106 = vld [vmem:[#allocation5 + $0xf0] sm:$0xff]
    %v107 = vld [vmem:[#allocation5 + $0xf8] sm:$0xff]
    %v108 = vmul.f32 %v44, %v44
    %v109 = vmul.f32 %v45, %v45
    %v110 = vmul.f32 %v46, %v46
    %v111 = vmul.f32 %v47, %v47
    %v112 = vmul.f32 %v48, %v48
    %v113 = vmul.f32 %v49, %v49
    %v114 = vmul.f32 %v50, %v50
    %v115 = vmul.f32 %v51, %v51
    %v116 = vmul.f32 %v52, %v52
    %v117 = vmul.f32 %v53, %v53
    %v118 = vmul.f32 %v54, %v54
    %v119 = vmul.f32 %v55, %v55
    %v120 = vmul.f32 %v56, %v56
    %v121 = vmul.f32 %v57, %v57
    %v122 = vmul.f32 %v58, %v58
    %v123 = vmul.f32 %v59, %v59
    %v124 = vmul.f32 %v60, %v60
    %v125 = vmul.f32 %v61, %v61
    %v126 = vmul.f32 %v62, %v62
    %v127 = vmul.f32 %v63, %v63
    %v128 = vmul.f32 %v64, %v64
    %v129 = vmul.f32 %v65, %v65
    %v130 = vmul.f32 %v66, %v66
    %v131 = vmul.f32 %v67, %v67
    %v132 = vmul.f32 %v68, %v68
    %v133 = vmul.f32 %v69, %v69
    %v134 = vmul.f32 %v70, %v70
    %v135 = vmul.f32 %v71, %v71
    %v136 = vmul.f32 %v72, %v72
    %v137 = vmul.f32 %v73, %v73
    %v138 = vmul.f32 %v74, %v74
    %v139 = vmul.f32 %v75, %v75
    %v140 = vmul.f32 %v76, %v76
    %v141 = vmul.f32 %v77, %v77
    %v142 = vmul.f32 %v78, %v78
    %v143 = vmul.f32 %v79, %v79
    %v144 = vmul.f32 %v80, %v80
    %v145 = vmul.f32 %v81, %v81
    %v146 = vmul.f32 %v82, %v82
    %v147 = vmul.f32 %v83, %v83
    %v148 = vmul.f32 %v84, %v84
    %v149 = vmul.f32 %v85, %v85
    %v150 = vmul.f32 %v86, %v86
    %v151 = vmul.f32 %v87, %v87
    %v152 = vmul.f32 %v88, %v88
    %v153 = vmul.f32 %v89, %v89
    %v154 = vmul.f32 %v90, %v90
    %v155 = vmul.f32 %v91, %v91
    %v156 = vmul.f32 %v92, %v92
    %v157 = vmul.f32 %v93, %v93
    %v158 = vmul.f32 %v94, %v94
    %v159 = vmul.f32 %v95, %v95
    %v160 = vmul.f32 %v96, %v96
    %v161 = vmul.f32 %v97, %v97
    %v162 = vmul.f32 %v98, %v98
    %v163 = vmul.f32 %v99, %v99
    %v164 = vmul.f32 %v100, %v100
    %v165 = vmul.f32 %v101, %v101
    %v166 = vmul.f32 %v102, %v102
    %v167 = vmul.f32 %v103, %v103
    %v168 = vmul.f32 %v104, %v104
    %v169 = vmul.f32 %v105, %v105
    %v170 = vmul.f32 %v106, %v106
    %v171 = vmul.f32 %v107, %v107
    %v172 = vmul.f32 %v44, %v76
    %v173 = vmul.f32 %v45, %v77
    %v174 = vmul.f32 %v46, %v78
    %v175 = vmul.f32 %v47, %v79
    %v176 = vmul.f32 %v48, %v80
    %v177 = vmul.f32 %v49, %v81
    %v178 = vmul.f32 %v50, %v82
    %v179 = vmul.f32 %v51, %v83
    %v180 = vmul.f32 %v52, %v84
    %v181 = vmul.f32 %v53, %v85
    %v182 = vmul.f32 %v54, %v86
    %v183 = vmul.f32 %v55, %v87
    %v184 = vmul.f32 %v56, %v88
    %v185 = vmul.f32 %v57, %v89
    %v186 = vmul.f32 %v58, %v90
    %v187 = vmul.f32 %v59, %v91
    %v188 = vmul.f32 %v60, %v92
    %v189 = vmul.f32 %v61, %v93
    %v190 = vmul.f32 %v62, %v94
    %v191 = vmul.f32 %v63, %v95
    %v192 = vmul.f32 %v64, %v96
    %v193 = vmul.f32 %v65, %v97
    %v194 = vmul.f32 %v66, %v98
    %v195 = vmul.f32 %v67, %v99
    %v196 = vmul.f32 %v68, %v100
    %v197 = vmul.f32 %v69, %v101
    %v198 = vmul.f32 %v70, %v102
    %v199 = vmul.f32 %v71, %v103
    %v200 = vmul.f32 %v72, %v104
    %v201 = vmul.f32 %v73, %v105
    %v202 = vmul.f32 %v74, %v106
    %v203 = vmul.f32 %v75, %v107
    %vm236 = vcmask 1046528
    %v237 = vrot.slane %v44, 1
    %v238 = vrot.slane %v45, 1
    %v239 = vsel %vm236, %v237, %v238
    %v240 = vrot.slane %v46, 1
    %v241 = vrot.slane %v47, 1
    %v242 = vsel %vm236, %v240, %v241
    %v243 = vrot.slane %v48, 1
    %v244 = vrot.slane %v49, 1
    %v245 = vsel %vm236, %v243, %v244
    %v246 = vrot.slane %v50, 1
    %v247 = vrot.slane %v51, 1
    %v248 = vsel %vm236, %v246, %v247
    %v249 = vrot.slane %v52, 1
    %v250 = vrot.slane %v53, 1
    %v251 = vsel %vm236, %v249, %v250
    %v252 = vrot.slane %v54, 1
    %v253 = vrot.slane %v55, 1
    %v254 = vsel %vm236, %v252, %v253
    %v255 = vrot.slane %v56, 1
    %v256 = vrot.slane %v57, 1
    %v257 = vsel %vm236, %v255, %v256
    %v258 = vrot.slane %v58, 1
    %v259 = vrot.slane %v59, 1
    %v260 = vsel %vm236, %v258, %v259
    %v261 = vrot.slane %v60, 1
    %v262 = vrot.slane %v61, 1
    %v263 = vsel %vm236, %v261, %v262
    %v264 = vrot.slane %v62, 1
    %v265 = vrot.slane %v63, 1
    %v266 = vsel %vm236, %v264, %v265
    %v267 = vrot.slane %v64, 1
    %v268 = vrot.slane %v65, 1
    %v269 = vsel %vm236, %v267, %v268
    %v270 = vrot.slane %v66, 1
    %v271 = vrot.slane %v67, 1
    %v272 = vsel %vm236, %v270, %v271
    %v273 = vrot.slane %v68, 1
    %v274 = vrot.slane %v69, 1
    %v275 = vsel %vm236, %v273, %v274
    %v276 = vrot.slane %v70, 1
    %v277 = vrot.slane %v71, 1
    %v278 = vsel %vm236, %v276, %v277
    %v279 = vrot.slane %v72, 1
    %v280 = vrot.slane %v73, 1
    %v281 = vsel %vm236, %v279, %v280
    %v282 = vrot.slane %v74, 1
    %v283 = vrot.slane %v75, 1
    %v284 = vsel %vm236, %v282, %v283
    %v317 = vadd.f32 %v44, %v239
    %v318 = vadd.f32 %v45, %v238
    %v319 = vadd.f32 %v46, %v242
    %v320 = vadd.f32 %v47, %v241
    %v321 = vadd.f32 %v48, %v245
    %v322 = vadd.f32 %v49, %v244
    %v323 = vadd.f32 %v50, %v248
    %v324 = vadd.f32 %v51, %v247
    %v325 = vadd.f32 %v52, %v251
    %v326 = vadd.f32 %v53, %v250
    %v327 = vadd.f32 %v54, %v254
    %v328 = vadd.f32 %v55, %v253
    %v329 = vadd.f32 %v56, %v257
    %v330 = vadd.f32 %v57, %v256
    %v331 = vadd.f32 %v58, %v260
    %v332 = vadd.f32 %v59, %v259
    %v333 = vadd.f32 %v60, %v263
    %v334 = vadd.f32 %v61, %v262
    %v335 = vadd.f32 %v62, %v266
    %v336 = vadd.f32 %v63, %v265
    %v337 = vadd.f32 %v64, %v269
    %v338 = vadd.f32 %v65, %v268
    %v339 = vadd.f32 %v66, %v272
    %v340 = vadd.f32 %v67, %v271
    %v341 = vadd.f32 %v68, %v275
    %v342 = vadd.f32 %v69, %v274
    %v343 = vadd.f32 %v70, %v278
    %v344 = vadd.f32 %v71, %v277
    %v345 = vadd.f32 %v72, %v281
    %v346 = vadd.f32 %v73, %v280
    %v347 = vadd.f32 %v74, %v284
    %v348 = vadd.f32 %v75, %v283
    %v381 = vrot.slane %v76, 1
    %v382 = vrot.slane %v77, 1
    %v383 = vsel %vm236, %v381, %v382
    %v384 = vrot.slane %v78, 1
    %v385 = vrot.slane %v79, 1
    %v386 = vsel %vm236, %v384, %v385
    %v387 = vrot.slane %v80, 1
    %v388 = vrot.slane %v81, 1
    %v389 = vsel %vm236, %v387, %v388
    %v390 = vrot.slane %v82, 1
    %v391 = vrot.slane %v83, 1
    %v392 = vsel %vm236, %v390, %v391
    %v393 = vrot.slane %v84, 1
    %v394 = vrot.slane %v85, 1
    %v395 = vsel %vm236, %v393, %v394
    %v396 = vrot.slane %v86, 1
    %v397 = vrot.slane %v87, 1
    %v398 = vsel %vm236, %v396, %v397
    %v399 = vrot.slane %v88, 1
    %v400 = vrot.slane %v89, 1
    %v401 = vsel %vm236, %v399, %v400
    %v402 = vrot.slane %v90, 1
    %v403 = vrot.slane %v91, 1
    %v404 = vsel %vm236, %v402, %v403
    %v405 = vrot.slane %v92, 1
    %v406 = vrot.slane %v93, 1
    %v407 = vsel %vm236, %v405, %v406
    %v408 = vrot.slane %v94, 1
    %v409 = vrot.slane %v95, 1
    %v410 = vsel %vm236, %v408, %v409
    %v411 = vrot.slane %v96, 1
    %v412 = vrot.slane %v97, 1
    %v413 = vsel %vm236, %v411, %v412
    %v414 = vrot.slane %v98, 1
    %v415 = vrot.slane %v99, 1
    %v416 = vsel %vm236, %v414, %v415
    %v417 = vrot.slane %v100, 1
    %v418 = vrot.slane %v101, 1
    %v419 = vsel %vm236, %v417, %v418
    %v420 = vrot.slane %v102, 1
    %v421 = vrot.slane %v103, 1
    %v422 = vsel %vm236, %v420, %v421
    %v423 = vrot.slane %v104, 1
    %v424 = vrot.slane %v105, 1
    %v425 = vsel %vm236, %v423, %v424
    %v426 = vrot.slane %v106, 1
    %v427 = vrot.slane %v107, 1
    %v428 = vsel %vm236, %v426, %v427
    %v461 = vadd.f32 %v76, %v383
    %v462 = vadd.f32 %v77, %v382
    %v463 = vadd.f32 %v78, %v386
    %v464 = vadd.f32 %v79, %v385
    %v465 = vadd.f32 %v80, %v389
    %v466 = vadd.f32 %v81, %v388
    %v467 = vadd.f32 %v82, %v392
    %v468 = vadd.f32 %v83, %v391
    %v469 = vadd.f32 %v84, %v395
    %v470 = vadd.f32 %v85, %v394
    %v471 = vadd.f32 %v86, %v398
    %v472 = vadd.f32 %v87, %v397
    %v473 = vadd.f32 %v88, %v401
    %v474 = vadd.f32 %v89, %v400
    %v475 = vadd.f32 %v90, %v404
    %v476 = vadd.f32 %v91, %v403
    %v477 = vadd.f32 %v92, %v407
    %v478 = vadd.f32 %v93, %v406
    %v479 = vadd.f32 %v94, %v410
    %v480 = vadd.f32 %v95, %v409
    %v481 = vadd.f32 %v96, %v413
    %v482 = vadd.f32 %v97, %v412
    %v483 = vadd.f32 %v98, %v416
    %v484 = vadd.f32 %v99, %v415
    %v485 = vadd.f32 %v100, %v419
    %v486 = vadd.f32 %v101, %v418
    %v487 = vadd.f32 %v102, %v422
    %v488 = vadd.f32 %v103, %v421
    %v489 = vadd.f32 %v104, %v425
    %v490 = vadd.f32 %v105, %v424
    %v491 = vadd.f32 %v106, %v428
    %v492 = vadd.f32 %v107, %v427
    %v525 = vrot.slane %v108, 1
    %v526 = vrot.slane %v109, 1
    %v527 = vsel %vm236, %v525, %v526
    %v528 = vrot.slane %v110, 1
    %v529 = vrot.slane %v111, 1
    %v530 = vsel %vm236, %v528, %v529
    %v531 = vrot.slane %v112, 1
    %v532 = vrot.slane %v113, 1
    %v533 = vsel %vm236, %v531, %v532
    %v534 = vrot.slane %v114, 1
    %v535 = vrot.slane %v115, 1
    %v536 = vsel %vm236, %v534, %v535
    %v537 = vrot.slane %v116, 1
    %v538 = vrot.slane %v117, 1
    %v539 = vsel %vm236, %v537, %v538
    %v540 = vrot.slane %v118, 1
    %v541 = vrot.slane %v119, 1
    %v542 = vsel %vm236, %v540, %v541
    %v543 = vrot.slane %v120, 1
    %v544 = vrot.slane %v121, 1
    %v545 = vsel %vm236, %v543, %v544
    %v546 = vrot.slane %v122, 1
    %v547 = vrot.slane %v123, 1
    %v548 = vsel %vm236, %v546, %v547
    %v549 = vrot.slane %v124, 1
    %v550 = vrot.slane %v125, 1
    %v551 = vsel %vm236, %v549, %v550
    %v552 = vrot.slane %v126, 1
    %v553 = vrot.slane %v127, 1
    %v554 = vsel %vm236, %v552, %v553
    %v555 = vrot.slane %v128, 1
    %v556 = vrot.slane %v129, 1
    %v557 = vsel %vm236, %v555, %v556
    %v558 = vrot.slane %v130, 1
    %v559 = vrot.slane %v131, 1
    %v560 = vsel %vm236, %v558, %v559
    %v561 = vrot.slane %v132, 1
    %v562 = vrot.slane %v133, 1
    %v563 = vsel %vm236, %v561, %v562
    %v564 = vrot.slane %v134, 1
    %v565 = vrot.slane %v135, 1
    %v566 = vsel %vm236, %v564, %v565
    %v567 = vrot.slane %v136, 1
    %v568 = vrot.slane %v137, 1
    %v569 = vsel %vm236, %v567, %v568
    %v570 = vrot.slane %v138, 1
    %v571 = vrot.slane %v139, 1
    %v572 = vsel %vm236, %v570, %v571
    %v605 = vadd.f32 %v108, %v527
    %v606 = vadd.f32 %v109, %v526
    %v607 = vadd.f32 %v110, %v530
    %v608 = vadd.f32 %v111, %v529
    %v609 = vadd.f32 %v112, %v533
    %v610 = vadd.f32 %v113, %v532
    %v611 = vadd.f32 %v114, %v536
    %v612 = vadd.f32 %v115, %v535
    %v613 = vadd.f32 %v116, %v539
    %v614 = vadd.f32 %v117, %v538
    %v615 = vadd.f32 %v118, %v542
    %v616 = vadd.f32 %v119, %v541
    %v617 = vadd.f32 %v120, %v545
    %v618 = vadd.f32 %v121, %v544
    %v619 = vadd.f32 %v122, %v548
    %v620 = vadd.f32 %v123, %v547
    %v621 = vadd.f32 %v124, %v551
    %v622 = vadd.f32 %v125, %v550
    %v623 = vadd.f32 %v126, %v554
    %v624 = vadd.f32 %v127, %v553
    %v625 = vadd.f32 %v128, %v557
    %v626 = vadd.f32 %v129, %v556
    %v627 = vadd.f32 %v130, %v560
    %v628 = vadd.f32 %v131, %v559
    %v629 = vadd.f32 %v132, %v563
    %v630 = vadd.f32 %v133, %v562
    %v631 = vadd.f32 %v134, %v566
    %v632 = vadd.f32 %v135, %v565
    %v633 = vadd.f32 %v136, %v569
    %v634 = vadd.f32 %v137, %v568
    %v635 = vadd.f32 %v138, %v572
    %v636 = vadd.f32 %v139, %v571
    %v669 = vrot.slane %v140, 1
    %v670 = vrot.slane %v141, 1
    %v671 = vsel %vm236, %v669, %v670
    %v672 = vrot.slane %v142, 1
    %v673 = vrot.slane %v143, 1
    %v674 = vsel %vm236, %v672, %v673
    %v675 = vrot.slane %v144, 1
    %v676 = vrot.slane %v145, 1
    %v677 = vsel %vm236, %v675, %v676
    %v678 = vrot.slane %v146, 1
    %v679 = vrot.slane %v147, 1
    %v680 = vsel %vm236, %v678, %v679
    %v681 = vrot.slane %v148, 1
    %v682 = vrot.slane %v149, 1
    %v683 = vsel %vm236, %v681, %v682
    %v684 = vrot.slane %v150, 1
    %v685 = vrot.slane %v151, 1
    %v686 = vsel %vm236, %v684, %v685
    %v687 = vrot.slane %v152, 1
    %v688 = vrot.slane %v153, 1
    %v689 = vsel %vm236, %v687, %v688
    %v690 = vrot.slane %v154, 1
    %v691 = vrot.slane %v155, 1
    %v692 = vsel %vm236, %v690, %v691
    %v693 = vrot.slane %v156, 1
    %v694 = vrot.slane %v157, 1
    %v695 = vsel %vm236, %v693, %v694
    %v696 = vrot.slane %v158, 1
    %v697 = vrot.slane %v159, 1
    %v698 = vsel %vm236, %v696, %v697
    %v699 = vrot.slane %v160, 1
    %v700 = vrot.slane %v161, 1
    %v701 = vsel %vm236, %v699, %v700
    %v702 = vrot.slane %v162, 1
    %v703 = vrot.slane %v163, 1
    %v704 = vsel %vm236, %v702, %v703
    %v705 = vrot.slane %v164, 1
    %v706 = vrot.slane %v165, 1
    %v707 = vsel %vm236, %v705, %v706
    %v708 = vrot.slane %v166, 1
    %v709 = vrot.slane %v167, 1
    %v710 = vsel %vm236, %v708, %v709
    %v711 = vrot.slane %v168, 1
    %v712 = vrot.slane %v169, 1
    %v713 = vsel %vm236, %v711, %v712
    %v714 = vrot.slane %v170, 1
    %v715 = vrot.slane %v171, 1
    %v716 = vsel %vm236, %v714, %v715
    %v749 = vadd.f32 %v140, %v671
    %v750 = vadd.f32 %v141, %v670
    %v751 = vadd.f32 %v142, %v674
    %v752 = vadd.f32 %v143, %v673
    %v753 = vadd.f32 %v144, %v677
    %v754 = vadd.f32 %v145, %v676
    %v755 = vadd.f32 %v146, %v680
    %v756 = vadd.f32 %v147, %v679
    %v757 = vadd.f32 %v148, %v683
    %v758 = vadd.f32 %v149, %v682
    %v759 = vadd.f32 %v150, %v686
    %v760 = vadd.f32 %v151, %v685
    %v761 = vadd.f32 %v152, %v689
    %v762 = vadd.f32 %v153, %v688
    %v763 = vadd.f32 %v154, %v692
    %v764 = vadd.f32 %v155, %v691
    %v765 = vadd.f32 %v156, %v695
    %v766 = vadd.f32 %v157, %v694
    %v767 = vadd.f32 %v158, %v698
    %v768 = vadd.f32 %v159, %v697
    %v769 = vadd.f32 %v160, %v701
    %v770 = vadd.f32 %v161, %v700
    %v771 = vadd.f32 %v162, %v704
    %v772 = vadd.f32 %v163, %v703
    %v773 = vadd.f32 %v164, %v707
    %v774 = vadd.f32 %v165, %v706
    %v775 = vadd.f32 %v166, %v710
    %v776 = vadd.f32 %v167, %v709
    %v777 = vadd.f32 %v168, %v713
    %v778 = vadd.f32 %v169, %v712
    %v779 = vadd.f32 %v170, %v716
    %v780 = vadd.f32 %v171, %v715
    %v813 = vrot.slane %v172, 1
    %v814 = vrot.slane %v173, 1
    %v815 = vsel %vm236, %v813, %v814
    %v816 = vrot.slane %v174, 1
    %v817 = vrot.slane %v175, 1
    %v818 = vsel %vm236, %v816, %v817
    %v819 = vrot.slane %v176, 1
    %v820 = vrot.slane %v177, 1
    %v821 = vsel %vm236, %v819, %v820
    %v822 = vrot.slane %v178, 1
    %v823 = vrot.slane %v179, 1
    %v824 = vsel %vm236, %v822, %v823
    %v825 = vrot.slane %v180, 1
    %v826 = vrot.slane %v181, 1
    %v827 = vsel %vm236, %v825, %v826
    %v828 = vrot.slane %v182, 1
    %v829 = vrot.slane %v183, 1
    %v830 = vsel %vm236, %v828, %v829
    %v831 = vrot.slane %v184, 1
    %v832 = vrot.slane %v185, 1
    %v833 = vsel %vm236, %v831, %v832
    %v834 = vrot.slane %v186, 1
    %v835 = vrot.slane %v187, 1
    %v836 = vsel %vm236, %v834, %v835
    %v837 = vrot.slane %v188, 1
    %v838 = vrot.slane %v189, 1
    %v839 = vsel %vm236, %v837, %v838
    %v840 = vrot.slane %v190, 1
    %v841 = vrot.slane %v191, 1
    %v842 = vsel %vm236, %v840, %v841
    %v843 = vrot.slane %v192, 1
    %v844 = vrot.slane %v193, 1
    %v845 = vsel %vm236, %v843, %v844
    %v846 = vrot.slane %v194, 1
    %v847 = vrot.slane %v195, 1
    %v848 = vsel %vm236, %v846, %v847
    %v849 = vrot.slane %v196, 1
    %v850 = vrot.slane %v197, 1
    %v851 = vsel %vm236, %v849, %v850
    %v852 = vrot.slane %v198, 1
    %v853 = vrot.slane %v199, 1
    %v854 = vsel %vm236, %v852, %v853
    %v855 = vrot.slane %v200, 1
    %v856 = vrot.slane %v201, 1
    %v857 = vsel %vm236, %v855, %v856
    %v858 = vrot.slane %v202, 1
    %v859 = vrot.slane %v203, 1
    %v860 = vsel %vm236, %v858, %v859
    %v893 = vadd.f32 %v172, %v815
    %v894 = vadd.f32 %v173, %v814
    %v895 = vadd.f32 %v174, %v818
    %v896 = vadd.f32 %v175, %v817
    %v897 = vadd.f32 %v176, %v821
    %v898 = vadd.f32 %v177, %v820
    %v899 = vadd.f32 %v178, %v824
    %v900 = vadd.f32 %v179, %v823
    %v901 = vadd.f32 %v180, %v827
    %v902 = vadd.f32 %v181, %v826
    %v903 = vadd.f32 %v182, %v830
    %v904 = vadd.f32 %v183, %v829
    %v905 = vadd.f32 %v184, %v833
    %v906 = vadd.f32 %v185, %v832
    %v907 = vadd.f32 %v186, %v836
    %v908 = vadd.f32 %v187, %v835
    %v909 = vadd.f32 %v188, %v839
    %v910 = vadd.f32 %v189, %v838
    %v911 = vadd.f32 %v190, %v842
    %v912 = vadd.f32 %v191, %v841
    %v913 = vadd.f32 %v192, %v845
    %v914 = vadd.f32 %v193, %v844
    %v915 = vadd.f32 %v194, %v848
    %v916 = vadd.f32 %v195, %v847
    %v917 = vadd.f32 %v196, %v851
    %v918 = vadd.f32 %v197, %v850
    %v919 = vadd.f32 %v198, %v854
    %v920 = vadd.f32 %v199, %v853
    %v921 = vadd.f32 %v200, %v857
    %v922 = vadd.f32 %v201, %v856
    %v923 = vadd.f32 %v202, %v860
    %v924 = vadd.f32 %v203, %v859
    %vm925 = vcmask 1045504
    %v926 = vrot.slane %v44, 2
    %v927 = vrot.slane %v45, 2
    %v928 = vsel %vm925, %v926, %v927
    %v929 = vrot.slane %v46, 2
    %v930 = vrot.slane %v47, 2
    %v931 = vsel %vm925, %v929, %v930
    %v932 = vrot.slane %v48, 2
    %v933 = vrot.slane %v49, 2
    %v934 = vsel %vm925, %v932, %v933
    %v935 = vrot.slane %v50, 2
    %v936 = vrot.slane %v51, 2
    %v937 = vsel %vm925, %v935, %v936
    %v938 = vrot.slane %v52, 2
    %v939 = vrot.slane %v53, 2
    %v940 = vsel %vm925, %v938, %v939
    %v941 = vrot.slane %v54, 2
    %v942 = vrot.slane %v55, 2
    %v943 = vsel %vm925, %v941, %v942
    %v944 = vrot.slane %v56, 2
    %v945 = vrot.slane %v57, 2
    %v946 = vsel %vm925, %v944, %v945
    %v947 = vrot.slane %v58, 2
    %v948 = vrot.slane %v59, 2
    %v949 = vsel %vm925, %v947, %v948
    %v950 = vrot.slane %v60, 2
    %v951 = vrot.slane %v61, 2
    %v952 = vsel %vm925, %v950, %v951
    %v953 = vrot.slane %v62, 2
    %v954 = vrot.slane %v63, 2
    %v955 = vsel %vm925, %v953, %v954
    %v956 = vrot.slane %v64, 2
    %v957 = vrot.slane %v65, 2
    %v958 = vsel %vm925, %v956, %v957
    %v959 = vrot.slane %v66, 2
    %v960 = vrot.slane %v67, 2
    %v961 = vsel %vm925, %v959, %v960
    %v962 = vrot.slane %v68, 2
    %v963 = vrot.slane %v69, 2
    %v964 = vsel %vm925, %v962, %v963
    %v965 = vrot.slane %v70, 2
    %v966 = vrot.slane %v71, 2
    %v967 = vsel %vm925, %v965, %v966
    %v968 = vrot.slane %v72, 2
    %v969 = vrot.slane %v73, 2
    %v970 = vsel %vm925, %v968, %v969
    %v971 = vrot.slane %v74, 2
    %v972 = vrot.slane %v75, 2
    %v973 = vsel %vm925, %v971, %v972
    %v1006 = vadd.f32 %v317, %v928
    %v1007 = vadd.f32 %v318, %v927
    %v1008 = vadd.f32 %v319, %v931
    %v1009 = vadd.f32 %v320, %v930
    %v1010 = vadd.f32 %v321, %v934
    %v1011 = vadd.f32 %v322, %v933
    %v1012 = vadd.f32 %v323, %v937
    %v1013 = vadd.f32 %v324, %v936
    %v1014 = vadd.f32 %v325, %v940
    %v1015 = vadd.f32 %v326, %v939
    %v1016 = vadd.f32 %v327, %v943
    %v1017 = vadd.f32 %v328, %v942
    %v1018 = vadd.f32 %v329, %v946
    %v1019 = vadd.f32 %v330, %v945
    %v1020 = vadd.f32 %v331, %v949
    %v1021 = vadd.f32 %v332, %v948
    %v1022 = vadd.f32 %v333, %v952
    %v1023 = vadd.f32 %v334, %v951
    %v1024 = vadd.f32 %v335, %v955
    %v1025 = vadd.f32 %v336, %v954
    %v1026 = vadd.f32 %v337, %v958
    %v1027 = vadd.f32 %v338, %v957
    %v1028 = vadd.f32 %v339, %v961
    %v1029 = vadd.f32 %v340, %v960
    %v1030 = vadd.f32 %v341, %v964
    %v1031 = vadd.f32 %v342, %v963
    %v1032 = vadd.f32 %v343, %v967
    %v1033 = vadd.f32 %v344, %v966
    %v1034 = vadd.f32 %v345, %v970
    %v1035 = vadd.f32 %v346, %v969
    %v1036 = vadd.f32 %v347, %v973
    %v1037 = vadd.f32 %v348, %v972
    %v1038 = vrot.slane %v76, 2
    %v1039 = vrot.slane %v77, 2
    %v1040 = vsel %vm925, %v1038, %v1039
    %v1041 = vrot.slane %v78, 2
    %v1042 = vrot.slane %v79, 2
    %v1043 = vsel %vm925, %v1041, %v1042
    %v1044 = vrot.slane %v80, 2
    %v1045 = vrot.slane %v81, 2
    %v1046 = vsel %vm925, %v1044, %v1045
    %v1047 = vrot.slane %v82, 2
    %v1048 = vrot.slane %v83, 2
    %v1049 = vsel %vm925, %v1047, %v1048
    %v1050 = vrot.slane %v84, 2
    %v1051 = vrot.slane %v85, 2
    %v1052 = vsel %vm925, %v1050, %v1051
    %v1053 = vrot.slane %v86, 2
    %v1054 = vrot.slane %v87, 2
    %v1055 = vsel %vm925, %v1053, %v1054
    %v1056 = vrot.slane %v88, 2
    %v1057 = vrot.slane %v89, 2
    %v1058 = vsel %vm925, %v1056, %v1057
    %v1059 = vrot.slane %v90, 2
    %v1060 = vrot.slane %v91, 2
    %v1061 = vsel %vm925, %v1059, %v1060
    %v1062 = vrot.slane %v92, 2
    %v1063 = vrot.slane %v93, 2
    %v1064 = vsel %vm925, %v1062, %v1063
    %v1065 = vrot.slane %v94, 2
    %v1066 = vrot.slane %v95, 2
    %v1067 = vsel %vm925, %v1065, %v1066
    %v1068 = vrot.slane %v96, 2
    %v1069 = vrot.slane %v97, 2
    %v1070 = vsel %vm925, %v1068, %v1069
    %v1071 = vrot.slane %v98, 2
    %v1072 = vrot.slane %v99, 2
    %v1073 = vsel %vm925, %v1071, %v1072
    %v1074 = vrot.slane %v100, 2
    %v1075 = vrot.slane %v101, 2
    %v1076 = vsel %vm925, %v1074, %v1075
    %v1077 = vrot.slane %v102, 2
    %v1078 = vrot.slane %v103, 2
    %v1079 = vsel %vm925, %v1077, %v1078
    %v1080 = vrot.slane %v104, 2
    %v1081 = vrot.slane %v105, 2
    %v1082 = vsel %vm925, %v1080, %v1081
    %v1083 = vrot.slane %v106, 2
    %v1084 = vrot.slane %v107, 2
    %v1085 = vsel %vm925, %v1083, %v1084
    %v1118 = vadd.f32 %v461, %v1040
    %v1119 = vadd.f32 %v462, %v1039
    %v1120 = vadd.f32 %v463, %v1043
    %v1121 = vadd.f32 %v464, %v1042
    %v1122 = vadd.f32 %v465, %v1046
    %v1123 = vadd.f32 %v466, %v1045
    %v1124 = vadd.f32 %v467, %v1049
    %v1125 = vadd.f32 %v468, %v1048
    %v1126 = vadd.f32 %v469, %v1052
    %v1127 = vadd.f32 %v470, %v1051
    %v1128 = vadd.f32 %v471, %v1055
    %v1129 = vadd.f32 %v472, %v1054
    %v1130 = vadd.f32 %v473, %v1058
    %v1131 = vadd.f32 %v474, %v1057
    %v1132 = vadd.f32 %v475, %v1061
    %v1133 = vadd.f32 %v476, %v1060
    %v1134 = vadd.f32 %v477, %v1064
    %v1135 = vadd.f32 %v478, %v1063
    %v1136 = vadd.f32 %v479, %v1067
    %v1137 = vadd.f32 %v480, %v1066
    %v1138 = vadd.f32 %v481, %v1070
    %v1139 = vadd.f32 %v482, %v1069
    %v1140 = vadd.f32 %v483, %v1073
    %v1141 = vadd.f32 %v484, %v1072
    %v1142 = vadd.f32 %v485, %v1076
    %v1143 = vadd.f32 %v486, %v1075
    %v1144 = vadd.f32 %v487, %v1079
    %v1145 = vadd.f32 %v488, %v1078
    %v1146 = vadd.f32 %v489, %v1082
    %v1147 = vadd.f32 %v490, %v1081
    %v1148 = vadd.f32 %v491, %v1085
    %v1149 = vadd.f32 %v492, %v1084
    %v1150 = vrot.slane %v108, 2
    %v1151 = vrot.slane %v109, 2
    %v1152 = vsel %vm925, %v1150, %v1151
    %v1153 = vrot.slane %v110, 2
    %v1154 = vrot.slane %v111, 2
    %v1155 = vsel %vm925, %v1153, %v1154
    %v1156 = vrot.slane %v112, 2
    %v1157 = vrot.slane %v113, 2
    %v1158 = vsel %vm925, %v1156, %v1157
    %v1159 = vrot.slane %v114, 2
    %v1160 = vrot.slane %v115, 2
    %v1161 = vsel %vm925, %v1159, %v1160
    %v1162 = vrot.slane %v116, 2
    %v1163 = vrot.slane %v117, 2
    %v1164 = vsel %vm925, %v1162, %v1163
    %v1165 = vrot.slane %v118, 2
    %v1166 = vrot.slane %v119, 2
    %v1167 = vsel %vm925, %v1165, %v1166
    %v1168 = vrot.slane %v120, 2
    %v1169 = vrot.slane %v121, 2
    %v1170 = vsel %vm925, %v1168, %v1169
    %v1171 = vrot.slane %v122, 2
    %v1172 = vrot.slane %v123, 2
    %v1173 = vsel %vm925, %v1171, %v1172
    %v1174 = vrot.slane %v124, 2
    %v1175 = vrot.slane %v125, 2
    %v1176 = vsel %vm925, %v1174, %v1175
    %v1177 = vrot.slane %v126, 2
    %v1178 = vrot.slane %v127, 2
    %v1179 = vsel %vm925, %v1177, %v1178
    %v1180 = vrot.slane %v128, 2
    %v1181 = vrot.slane %v129, 2
    %v1182 = vsel %vm925, %v1180, %v1181
    %v1183 = vrot.slane %v130, 2
    %v1184 = vrot.slane %v131, 2
    %v1185 = vsel %vm925, %v1183, %v1184
    %v1186 = vrot.slane %v132, 2
    %v1187 = vrot.slane %v133, 2
    %v1188 = vsel %vm925, %v1186, %v1187
    %v1189 = vrot.slane %v134, 2
    %v1190 = vrot.slane %v135, 2
    %v1191 = vsel %vm925, %v1189, %v1190
    %v1192 = vrot.slane %v136, 2
    %v1193 = vrot.slane %v137, 2
    %v1194 = vsel %vm925, %v1192, %v1193
    %v1195 = vrot.slane %v138, 2
    %v1196 = vrot.slane %v139, 2
    %v1197 = vsel %vm925, %v1195, %v1196
    %v1230 = vadd.f32 %v605, %v1152
    %v1231 = vadd.f32 %v606, %v1151
    %v1232 = vadd.f32 %v607, %v1155
    %v1233 = vadd.f32 %v608, %v1154
    %v1234 = vadd.f32 %v609, %v1158
    %v1235 = vadd.f32 %v610, %v1157
    %v1236 = vadd.f32 %v611, %v1161
    %v1237 = vadd.f32 %v612, %v1160
    %v1238 = vadd.f32 %v613, %v1164
    %v1239 = vadd.f32 %v614, %v1163
    %v1240 = vadd.f32 %v615, %v1167
    %v1241 = vadd.f32 %v616, %v1166
    %v1242 = vadd.f32 %v617, %v1170
    %v1243 = vadd.f32 %v618, %v1169
    %v1244 = vadd.f32 %v619, %v1173
    %v1245 = vadd.f32 %v620, %v1172
    %v1246 = vadd.f32 %v621, %v1176
    %v1247 = vadd.f32 %v622, %v1175
    %v1248 = vadd.f32 %v623, %v1179
    %v1249 = vadd.f32 %v624, %v1178
    %v1250 = vadd.f32 %v625, %v1182
    %v1251 = vadd.f32 %v626, %v1181
    %v1252 = vadd.f32 %v627, %v1185
    %v1253 = vadd.f32 %v628, %v1184
    %v1254 = vadd.f32 %v629, %v1188
    %v1255 = vadd.f32 %v630, %v1187
    %v1256 = vadd.f32 %v631, %v1191
    %v1257 = vadd.f32 %v632, %v1190
    %v1258 = vadd.f32 %v633, %v1194
    %v1259 = vadd.f32 %v634, %v1193
    %v1260 = vadd.f32 %v635, %v1197
    %v1261 = vadd.f32 %v636, %v1196
    %v1262 = vrot.slane %v140, 2
    %v1263 = vrot.slane %v141, 2
    %v1264 = vsel %vm925, %v1262, %v1263
    %v1265 = vrot.slane %v142, 2
    %v1266 = vrot.slane %v143, 2
    %v1267 = vsel %vm925, %v1265, %v1266
    %v1268 = vrot.slane %v144, 2
    %v1269 = vrot.slane %v145, 2
    %v1270 = vsel %vm925, %v1268, %v1269
    %v1271 = vrot.slane %v146, 2
    %v1272 = vrot.slane %v147, 2
    %v1273 = vsel %vm925, %v1271, %v1272
    %v1274 = vrot.slane %v148, 2
    %v1275 = vrot.slane %v149, 2
    %v1276 = vsel %vm925, %v1274, %v1275
    %v1277 = vrot.slane %v150, 2
    %v1278 = vrot.slane %v151, 2
    %v1279 = vsel %vm925, %v1277, %v1278
    %v1280 = vrot.slane %v152, 2
    %v1281 = vrot.slane %v153, 2
    %v1282 = vsel %vm925, %v1280, %v1281
    %v1283 = vrot.slane %v154, 2
    %v1284 = vrot.slane %v155, 2
    %v1285 = vsel %vm925, %v1283, %v1284
    %v1286 = vrot.slane %v156, 2
    %v1287 = vrot.slane %v157, 2
    %v1288 = vsel %vm925, %v1286, %v1287
    %v1289 = vrot.slane %v158, 2
    %v1290 = vrot.slane %v159, 2
    %v1291 = vsel %vm925, %v1289, %v1290
    %v1292 = vrot.slane %v160, 2
    %v1293 = vrot.slane %v161, 2
    %v1294 = vsel %vm925, %v1292, %v1293
    %v1295 = vrot.slane %v162, 2
    %v1296 = vrot.slane %v163, 2
    %v1297 = vsel %vm925, %v1295, %v1296
    %v1298 = vrot.slane %v164, 2
    %v1299 = vrot.slane %v165, 2
    %v1300 = vsel %vm925, %v1298, %v1299
    %v1301 = vrot.slane %v166, 2
    %v1302 = vrot.slane %v167, 2
    %v1303 = vsel %vm925, %v1301, %v1302
    %v1304 = vrot.slane %v168, 2
    %v1305 = vrot.slane %v169, 2
    %v1306 = vsel %vm925, %v1304, %v1305
    %v1307 = vrot.slane %v170, 2
    %v1308 = vrot.slane %v171, 2
    %v1309 = vsel %vm925, %v1307, %v1308
    %v1342 = vadd.f32 %v749, %v1264
    %v1343 = vadd.f32 %v750, %v1263
    %v1344 = vadd.f32 %v751, %v1267
    %v1345 = vadd.f32 %v752, %v1266
    %v1346 = vadd.f32 %v753, %v1270
    %v1347 = vadd.f32 %v754, %v1269
    %v1348 = vadd.f32 %v755, %v1273
    %v1349 = vadd.f32 %v756, %v1272
    %v1350 = vadd.f32 %v757, %v1276
    %v1351 = vadd.f32 %v758, %v1275
    %v1352 = vadd.f32 %v759, %v1279
    %v1353 = vadd.f32 %v760, %v1278
    %v1354 = vadd.f32 %v761, %v1282
    %v1355 = vadd.f32 %v762, %v1281
    %v1356 = vadd.f32 %v763, %v1285
    %v1357 = vadd.f32 %v764, %v1284
    %v1358 = vadd.f32 %v765, %v1288
    %v1359 = vadd.f32 %v766, %v1287
    %v1360 = vadd.f32 %v767, %v1291
    %v1361 = vadd.f32 %v768, %v1290
    %v1362 = vadd.f32 %v769, %v1294
    %v1363 = vadd.f32 %v770, %v1293
    %v1364 = vadd.f32 %v771, %v1297
    %v1365 = vadd.f32 %v772, %v1296
    %v1366 = vadd.f32 %v773, %v1300
    %v1367 = vadd.f32 %v774, %v1299
    %v1368 = vadd.f32 %v775, %v1303
    %v1369 = vadd.f32 %v776, %v1302
    %v1370 = vadd.f32 %v777, %v1306
    %v1371 = vadd.f32 %v778, %v1305
    %v1372 = vadd.f32 %v779, %v1309
    %v1373 = vadd.f32 %v780, %v1308
    %v1374 = vrot.slane %v172, 2
    %v1375 = vrot.slane %v173, 2
    %v1376 = vsel %vm925, %v1374, %v1375
    %v1377 = vrot.slane %v174, 2
    %v1378 = vrot.slane %v175, 2
    %v1379 = vsel %vm925, %v1377, %v1378
    %v1380 = vrot.slane %v176, 2
    %v1381 = vrot.slane %v177, 2
    %v1382 = vsel %vm925, %v1380, %v1381
    %v1383 = vrot.slane %v178, 2
    %v1384 = vrot.slane %v179, 2
    %v1385 = vsel %vm925, %v1383, %v1384
    %v1386 = vrot.slane %v180, 2
    %v1387 = vrot.slane %v181, 2
    %v1388 = vsel %vm925, %v1386, %v1387
    %v1389 = vrot.slane %v182, 2
    %v1390 = vrot.slane %v183, 2
    %v1391 = vsel %vm925, %v1389, %v1390
    %v1392 = vrot.slane %v184, 2
    %v1393 = vrot.slane %v185, 2
    %v1394 = vsel %vm925, %v1392, %v1393
    %v1395 = vrot.slane %v186, 2
    %v1396 = vrot.slane %v187, 2
    %v1397 = vsel %vm925, %v1395, %v1396
    %v1398 = vrot.slane %v188, 2
    %v1399 = vrot.slane %v189, 2
    %v1400 = vsel %vm925, %v1398, %v1399
    %v1401 = vrot.slane %v190, 2
    %v1402 = vrot.slane %v191, 2
    %v1403 = vsel %vm925, %v1401, %v1402
    %v1404 = vrot.slane %v192, 2
    %v1405 = vrot.slane %v193, 2
    %v1406 = vsel %vm925, %v1404, %v1405
    %v1407 = vrot.slane %v194, 2
    %v1408 = vrot.slane %v195, 2
    %v1409 = vsel %vm925, %v1407, %v1408
    %v1410 = vrot.slane %v196, 2
    %v1411 = vrot.slane %v197, 2
    %v1412 = vsel %vm925, %v1410, %v1411
    %v1413 = vrot.slane %v198, 2
    %v1414 = vrot.slane %v199, 2
    %v1415 = vsel %vm925, %v1413, %v1414
    %v1416 = vrot.slane %v200, 2
    %v1417 = vrot.slane %v201, 2
    %v1418 = vsel %vm925, %v1416, %v1417
    %v1419 = vrot.slane %v202, 2
    %v1420 = vrot.slane %v203, 2
    %v1421 = vsel %vm925, %v1419, %v1420
    %v1454 = vadd.f32 %v893, %v1376
    %v1455 = vadd.f32 %v894, %v1375
    %v1456 = vadd.f32 %v895, %v1379
    %v1457 = vadd.f32 %v896, %v1378
    %v1458 = vadd.f32 %v897, %v1382
    %v1459 = vadd.f32 %v898, %v1381
    %v1460 = vadd.f32 %v899, %v1385
    %v1461 = vadd.f32 %v900, %v1384
    %v1462 = vadd.f32 %v901, %v1388
    %v1463 = vadd.f32 %v902, %v1387
    %v1464 = vadd.f32 %v903, %v1391
    %v1465 = vadd.f32 %v904, %v1390
    %v1466 = vadd.f32 %v905, %v1394
    %v1467 = vadd.f32 %v906, %v1393
    %v1468 = vadd.f32 %v907, %v1397
    %v1469 = vadd.f32 %v908, %v1396
    %v1470 = vadd.f32 %v909, %v1400
    %v1471 = vadd.f32 %v910, %v1399
    %v1472 = vadd.f32 %v911, %v1403
    %v1473 = vadd.f32 %v912, %v1402
    %v1474 = vadd.f32 %v913, %v1406
    %v1475 = vadd.f32 %v914, %v1405
    %v1476 = vadd.f32 %v915, %v1409
    %v1477 = vadd.f32 %v916, %v1408
    %v1478 = vadd.f32 %v917, %v1412
    %v1479 = vadd.f32 %v918, %v1411
    %v1480 = vadd.f32 %v919, %v1415
    %v1481 = vadd.f32 %v920, %v1414
    %v1482 = vadd.f32 %v921, %v1418
    %v1483 = vadd.f32 %v922, %v1417
    %v1484 = vadd.f32 %v923, %v1421
    %v1485 = vadd.f32 %v924, %v1420
    %v1486 = vadd.f32 %v1006, %v1008
    %v1487 = vadd.f32 %v1007, %v1009
    %v1488 = vadd.f32 %v1008, %v1010
    %v1489 = vadd.f32 %v1009, %v1011
    %v1490 = vadd.f32 %v1010, %v1012
    %v1491 = vadd.f32 %v1011, %v1013
    %v1492 = vadd.f32 %v1012, %v1014
    %v1493 = vadd.f32 %v1013, %v1015
    %v1494 = vadd.f32 %v1014, %v1016
    %v1495 = vadd.f32 %v1015, %v1017
    %v1496 = vadd.f32 %v1016, %v1018
    %v1497 = vadd.f32 %v1017, %v1019
    %v1498 = vadd.f32 %v1018, %v1020
    %v1499 = vadd.f32 %v1019, %v1021
    %v1500 = vadd.f32 %v1020, %v1022
    %v1501 = vadd.f32 %v1021, %v1023
    %v1502 = vadd.f32 %v1022, %v1024
    %v1503 = vadd.f32 %v1023, %v1025
    %v1504 = vadd.f32 %v1024, %v1026
    %v1505 = vadd.f32 %v1025, %v1027
    %v1506 = vadd.f32 %v1026, %v1028
    %v1507 = vadd.f32 %v1027, %v1029
    %v1508 = vadd.f32 %v1028, %v1030
    %v1509 = vadd.f32 %v1029, %v1031
    %v1510 = vadd.f32 %v1030, %v1032
    %v1511 = vadd.f32 %v1031, %v1033
    %v1512 = vadd.f32 %v1032, %v1034
    %v1513 = vadd.f32 %v1033, %v1035
    %v1514 = vadd.f32 %v1486, %v1010
    %v1515 = vadd.f32 %v1487, %v1011
    %v1516 = vadd.f32 %v1488, %v1012
    %v1517 = vadd.f32 %v1489, %v1013
    %v1518 = vadd.f32 %v1490, %v1014
    %v1519 = vadd.f32 %v1491, %v1015
    %v1520 = vadd.f32 %v1492, %v1016
    %v1521 = vadd.f32 %v1493, %v1017
    %v1522 = vadd.f32 %v1494, %v1018
    %v1523 = vadd.f32 %v1495, %v1019
    %v1524 = vadd.f32 %v1496, %v1020
    %v1525 = vadd.f32 %v1497, %v1021
    %v1526 = vadd.f32 %v1498, %v1022
    %v1527 = vadd.f32 %v1499, %v1023
    %v1528 = vadd.f32 %v1500, %v1024
    %v1529 = vadd.f32 %v1501, %v1025
    %v1530 = vadd.f32 %v1502, %v1026
    %v1531 = vadd.f32 %v1503, %v1027
    %v1532 = vadd.f32 %v1504, %v1028
    %v1533 = vadd.f32 %v1505, %v1029
    %v1534 = vadd.f32 %v1506, %v1030
    %v1535 = vadd.f32 %v1507, %v1031
    %v1536 = vadd.f32 %v1508, %v1032
    %v1537 = vadd.f32 %v1509, %v1033
    %v1538 = vadd.f32 %v1510, %v1034
    %v1539 = vadd.f32 %v1511, %v1035
    %v1540 = vadd.f32 %v1512, %v1036
    %v1541 = vadd.f32 %v1513, %v1037
    %v1542 = vmul.f32 %v1514, 0.11111111
    %v1543 = vmul.f32 %v1515, 0.11111111
    %v1544 = vmul.f32 %v1516, 0.11111111
    %v1545 = vmul.f32 %v1517, 0.11111111
    %v1546 = vmul.f32 %v1518, 0.11111111
    %v1547 = vmul.f32 %v1519, 0.11111111
    %v1548 = vmul.f32 %v1520, 0.11111111
    %v1549 = vmul.f32 %v1521, 0.11111111
    %v1550 = vmul.f32 %v1522, 0.11111111
    %v1551 = vmul.f32 %v1523, 0.11111111
    %v1552 = vmul.f32 %v1524, 0.11111111
    %v1553 = vmul.f32 %v1525, 0.11111111
    %v1554 = vmul.f32 %v1526, 0.11111111
    %v1555 = vmul.f32 %v1527, 0.11111111
    %v1556 = vmul.f32 %v1528, 0.11111111
    %v1557 = vmul.f32 %v1529, 0.11111111
    %v1558 = vmul.f32 %v1530, 0.11111111
    %v1559 = vmul.f32 %v1531, 0.11111111
    %v1560 = vmul.f32 %v1532, 0.11111111
    %v1561 = vmul.f32 %v1533, 0.11111111
    %v1562 = vmul.f32 %v1534, 0.11111111
    %v1563 = vmul.f32 %v1535, 0.11111111
    %v1564 = vmul.f32 %v1536, 0.11111111
    %v1565 = vmul.f32 %v1537, 0.11111111
    %v1566 = vmul.f32 %v1538, 0.11111111
    %v1567 = vmul.f32 %v1539, 0.11111111
    %v1568 = vmul.f32 %v1540, 0.11111111
    %v1569 = vmul.f32 %v1541, 0.11111111
    %v1570 = vadd.f32 %v1118, %v1120
    %v1571 = vadd.f32 %v1119, %v1121
    %v1572 = vadd.f32 %v1120, %v1122
    %v1573 = vadd.f32 %v1121, %v1123
    %v1574 = vadd.f32 %v1122, %v1124
    %v1575 = vadd.f32 %v1123, %v1125
    %v1576 = vadd.f32 %v1124, %v1126
    %v1577 = vadd.f32 %v1125, %v1127
    %v1578 = vadd.f32 %v1126, %v1128
    %v1579 = vadd.f32 %v1127, %v1129
    %v1580 = vadd.f32 %v1128, %v1130
    %v1581 = vadd.f32 %v1129, %v1131
    %v1582 = vadd.f32 %v1130, %v1132
    %v1583 = vadd.f32 %v1131, %v1133
    %v1584 = vadd.f32 %v1132, %v1134
    %v1585 = vadd.f32 %v1133, %v1135
    %v1586 = vadd.f32 %v1134, %v1136
    %v1587 = vadd.f32 %v1135, %v1137
    %v1588 = vadd.f32 %v1136, %v1138
    %v1589 = vadd.f32 %v1137, %v1139
    %v1590 = vadd.f32 %v1138, %v1140
    %v1591 = vadd.f32 %v1139, %v1141
    %v1592 = vadd.f32 %v1140, %v1142
    %v1593 = vadd.f32 %v1141, %v1143
    %v1594 = vadd.f32 %v1142, %v1144
    %v1595 = vadd.f32 %v1143, %v1145
    %v1596 = vadd.f32 %v1144, %v1146
    %v1597 = vadd.f32 %v1145, %v1147
    %v1598 = vadd.f32 %v1570, %v1122
    %v1599 = vadd.f32 %v1571, %v1123
    %v1600 = vadd.f32 %v1572, %v1124
    %v1601 = vadd.f32 %v1573, %v1125
    %v1602 = vadd.f32 %v1574, %v1126
    %v1603 = vadd.f32 %v1575, %v1127
    %v1604 = vadd.f32 %v1576, %v1128
    %v1605 = vadd.f32 %v1577, %v1129
    %v1606 = vadd.f32 %v1578, %v1130
    %v1607 = vadd.f32 %v1579, %v1131
    %v1608 = vadd.f32 %v1580, %v1132
    %v1609 = vadd.f32 %v1581, %v1133
    %v1610 = vadd.f32 %v1582, %v1134
    %v1611 = vadd.f32 %v1583, %v1135
    %v1612 = vadd.f32 %v1584, %v1136
    %v1613 = vadd.f32 %v1585, %v1137
    %v1614 = vadd.f32 %v1586, %v1138
    %v1615 = vadd.f32 %v1587, %v1139
    %v1616 = vadd.f32 %v1588, %v1140
    %v1617 = vadd.f32 %v1589, %v1141
    %v1618 = vadd.f32 %v1590, %v1142
    %v1619 = vadd.f32 %v1591, %v1143
    %v1620 = vadd.f32 %v1592, %v1144
    %v1621 = vadd.f32 %v1593, %v1145
    %v1622 = vadd.f32 %v1594, %v1146
    %v1623 = vadd.f32 %v1595, %v1147
    %v1624 = vadd.f32 %v1596, %v1148
    %v1625 = vadd.f32 %v1597, %v1149
    %v1626 = vmul.f32 %v1598, 0.11111111
    %v1627 = vmul.f32 %v1599, 0.11111111
    %v1628 = vmul.f32 %v1600, 0.11111111
    %v1629 = vmul.f32 %v1601, 0.11111111
    %v1630 = vmul.f32 %v1602, 0.11111111
    %v1631 = vmul.f32 %v1603, 0.11111111
    %v1632 = vmul.f32 %v1604, 0.11111111
    %v1633 = vmul.f32 %v1605, 0.11111111
    %v1634 = vmul.f32 %v1606, 0.11111111
    %v1635 = vmul.f32 %v1607, 0.11111111
    %v1636 = vmul.f32 %v1608, 0.11111111
    %v1637 = vmul.f32 %v1609, 0.11111111
    %v1638 = vmul.f32 %v1610, 0.11111111
    %v1639 = vmul.f32 %v1611, 0.11111111
    %v1640 = vmul.f32 %v1612, 0.11111111
    %v1641 = vmul.f32 %v1613, 0.11111111
    %v1642 = vmul.f32 %v1614, 0.11111111
    %v1643 = vmul.f32 %v1615, 0.11111111
    %v1644 = vmul.f32 %v1616, 0.11111111
    %v1645 = vmul.f32 %v1617, 0.11111111
    %v1646 = vmul.f32 %v1618, 0.11111111
    %v1647 = vmul.f32 %v1619, 0.11111111
    %v1648 = vmul.f32 %v1620, 0.11111111
    %v1649 = vmul.f32 %v1621, 0.11111111
    %v1650 = vmul.f32 %v1622, 0.11111111
    %v1651 = vmul.f32 %v1623, 0.11111111
    %v1652 = vmul.f32 %v1624, 0.11111111
    %v1653 = vmul.f32 %v1625, 0.11111111
    %v1654 = vadd.f32 %v1230, %v1232
    %v1655 = vadd.f32 %v1231, %v1233
    %v1656 = vadd.f32 %v1232, %v1234
    %v1657 = vadd.f32 %v1233, %v1235
    %v1658 = vadd.f32 %v1234, %v1236
    %v1659 = vadd.f32 %v1235, %v1237
    %v1660 = vadd.f32 %v1236, %v1238
    %v1661 = vadd.f32 %v1237, %v1239
    %v1662 = vadd.f32 %v1238, %v1240
    %v1663 = vadd.f32 %v1239, %v1241
    %v1664 = vadd.f32 %v1240, %v1242
    %v1665 = vadd.f32 %v1241, %v1243
    %v1666 = vadd.f32 %v1242, %v1244
    %v1667 = vadd.f32 %v1243, %v1245
    %v1668 = vadd.f32 %v1244, %v1246
    %v1669 = vadd.f32 %v1245, %v1247
    %v1670 = vadd.f32 %v1246, %v1248
    %v1671 = vadd.f32 %v1247, %v1249
    %v1672 = vadd.f32 %v1248, %v1250
    %v1673 = vadd.f32 %v1249, %v1251
    %v1674 = vadd.f32 %v1250, %v1252
    %v1675 = vadd.f32 %v1251, %v1253
    %v1676 = vadd.f32 %v1252, %v1254
    %v1677 = vadd.f32 %v1253, %v1255
    %v1678 = vadd.f32 %v1254, %v1256
    %v1679 = vadd.f32 %v1255, %v1257
    %v1680 = vadd.f32 %v1256, %v1258
    %v1681 = vadd.f32 %v1257, %v1259
    %v1682 = vadd.f32 %v1654, %v1234
    %v1683 = vadd.f32 %v1655, %v1235
    %v1684 = vadd.f32 %v1656, %v1236
    %v1685 = vadd.f32 %v1657, %v1237
    %v1686 = vadd.f32 %v1658, %v1238
    %v1687 = vadd.f32 %v1659, %v1239
    %v1688 = vadd.f32 %v1660, %v1240
    %v1689 = vadd.f32 %v1661, %v1241
    %v1690 = vadd.f32 %v1662, %v1242
    %v1691 = vadd.f32 %v1663, %v1243
    %v1692 = vadd.f32 %v1664, %v1244
    %v1693 = vadd.f32 %v1665, %v1245
    %v1694 = vadd.f32 %v1666, %v1246
    %v1695 = vadd.f32 %v1667, %v1247
    %v1696 = vadd.f32 %v1668, %v1248
    %v1697 = vadd.f32 %v1669, %v1249
    %v1698 = vadd.f32 %v1670, %v1250
    %v1699 = vadd.f32 %v1671, %v1251
    %v1700 = vadd.f32 %v1672, %v1252
    %v1701 = vadd.f32 %v1673, %v1253
    %v1702 = vadd.f32 %v1674, %v1254
    %v1703 = vadd.f32 %v1675, %v1255
    %v1704 = vadd.f32 %v1676, %v1256
    %v1705 = vadd.f32 %v1677, %v1257
    %v1706 = vadd.f32 %v1678, %v1258
    %v1707 = vadd.f32 %v1679, %v1259
    %v1708 = vadd.f32 %v1680, %v1260
    %v1709 = vadd.f32 %v1681, %v1261
    %v1710 = vmul.f32 %v1682, 0.125
    %v1711 = vmul.f32 %v1683, 0.125
    %v1712 = vmul.f32 %v1684, 0.125
    %v1713 = vmul.f32 %v1685, 0.125
    %v1714 = vmul.f32 %v1686, 0.125
    %v1715 = vmul.f32 %v1687, 0.125
    %v1716 = vmul.f32 %v1688, 0.125
    %v1717 = vmul.f32 %v1689, 0.125
    %v1718 = vmul.f32 %v1690, 0.125
    %v1719 = vmul.f32 %v1691, 0.125
    %v1720 = vmul.f32 %v1692, 0.125
    %v1721 = vmul.f32 %v1693, 0.125
    %v1722 = vmul.f32 %v1694, 0.125
    %v1723 = vmul.f32 %v1695, 0.125
    %v1724 = vmul.f32 %v1696, 0.125
    %v1725 = vmul.f32 %v1697, 0.125
    %v1726 = vmul.f32 %v1698, 0.125
    %v1727 = vmul.f32 %v1699, 0.125
    %v1728 = vmul.f32 %v1700, 0.125
    %v1729 = vmul.f32 %v1701, 0.125
    %v1730 = vmul.f32 %v1702, 0.125
    %v1731 = vmul.f32 %v1703, 0.125
    %v1732 = vmul.f32 %v1704, 0.125
    %v1733 = vmul.f32 %v1705, 0.125
    %v1734 = vmul.f32 %v1706, 0.125
    %v1735 = vmul.f32 %v1707, 0.125
    %v1736 = vmul.f32 %v1708, 0.125
    %v1737 = vmul.f32 %v1709, 0.125
    %v1738 = vmul.f32 %v1542, %v1542
    %v1739 = vmul.f32 %v1543, %v1543
    %v1740 = vmul.f32 %v1544, %v1544
    %v1741 = vmul.f32 %v1545, %v1545
    %v1742 = vmul.f32 %v1546, %v1546
    %v1743 = vmul.f32 %v1547, %v1547
    %v1744 = vmul.f32 %v1548, %v1548
    %v1745 = vmul.f32 %v1549, %v1549
    %v1746 = vmul.f32 %v1550, %v1550
    %v1747 = vmul.f32 %v1551, %v1551
    %v1748 = vmul.f32 %v1552, %v1552
    %v1749 = vmul.f32 %v1553, %v1553
    %v1750 = vmul.f32 %v1554, %v1554
    %v1751 = vmul.f32 %v1555, %v1555
    %v1752 = vmul.f32 %v1556, %v1556
    %v1753 = vmul.f32 %v1557, %v1557
    %v1754 = vmul.f32 %v1558, %v1558
    %v1755 = vmul.f32 %v1559, %v1559
    %v1756 = vmul.f32 %v1560, %v1560
    %v1757 = vmul.f32 %v1561, %v1561
    %v1758 = vmul.f32 %v1562, %v1562
    %v1759 = vmul.f32 %v1563, %v1563
    %v1760 = vmul.f32 %v1564, %v1564
    %v1761 = vmul.f32 %v1565, %v1565
    %v1762 = vmul.f32 %v1566, %v1566
    %v1763 = vmul.f32 %v1567, %v1567
    %v1764 = vmul.f32 %v1568, %v1568
    %v1765 = vmul.f32 %v1569, %v1569
    %v1766 = vsub.f32 %v1710, %v1738
    %v1767 = vsub.f32 %v1711, %v1739
    %v1768 = vsub.f32 %v1712, %v1740
    %v1769 = vsub.f32 %v1713, %v1741
    %v1770 = vsub.f32 %v1714, %v1742
    %v1771 = vsub.f32 %v1715, %v1743
    %v1772 = vsub.f32 %v1716, %v1744
    %v1773 = vsub.f32 %v1717, %v1745
    %v1774 = vsub.f32 %v1718, %v1746
    %v1775 = vsub.f32 %v1719, %v1747
    %v1776 = vsub.f32 %v1720, %v1748
    %v1777 = vsub.f32 %v1721, %v1749
    %v1778 = vsub.f32 %v1722, %v1750
    %v1779 = vsub.f32 %v1723, %v1751
    %v1780 = vsub.f32 %v1724, %v1752
    %v1781 = vsub.f32 %v1725, %v1753
    %v1782 = vsub.f32 %v1726, %v1754
    %v1783 = vsub.f32 %v1727, %v1755
    %v1784 = vsub.f32 %v1728, %v1756
    %v1785 = vsub.f32 %v1729, %v1757
    %v1786 = vsub.f32 %v1730, %v1758
    %v1787 = vsub.f32 %v1731, %v1759
    %v1788 = vsub.f32 %v1732, %v1760
    %v1789 = vsub.f32 %v1733, %v1761
    %v1790 = vsub.f32 %v1734, %v1762
    %v1791 = vsub.f32 %v1735, %v1763
    %v1792 = vsub.f32 %v1736, %v1764
    %v1793 = vsub.f32 %v1737, %v1765
    %v1794 = vadd.f32 %v1342, %v1344
    %v1795 = vadd.f32 %v1343, %v1345
    %v1796 = vadd.f32 %v1344, %v1346
    %v1797 = vadd.f32 %v1345, %v1347
    %v1798 = vadd.f32 %v1346, %v1348
    %v1799 = vadd.f32 %v1347, %v1349
    %v1800 = vadd.f32 %v1348, %v1350
    %v1801 = vadd.f32 %v1349, %v1351
    %v1802 = vadd.f32 %v1350, %v1352
    %v1803 = vadd.f32 %v1351, %v1353
    %v1804 = vadd.f32 %v1352, %v1354
    %v1805 = vadd.f32 %v1353, %v1355
    %v1806 = vadd.f32 %v1354, %v1356
    %v1807 = vadd.f32 %v1355, %v1357
    %v1808 = vadd.f32 %v1356, %v1358
    %v1809 = vadd.f32 %v1357, %v1359
    %v1810 = vadd.f32 %v1358, %v1360
    %v1811 = vadd.f32 %v1359, %v1361
    %v1812 = vadd.f32 %v1360, %v1362
    %v1813 = vadd.f32 %v1361, %v1363
    %v1814 = vadd.f32 %v1362, %v1364
    %v1815 = vadd.f32 %v1363, %v1365
    %v1816 = vadd.f32 %v1364, %v1366
    %v1817 = vadd.f32 %v1365, %v1367
    %v1818 = vadd.f32 %v1366, %v1368
    %v1819 = vadd.f32 %v1367, %v1369
    %v1820 = vadd.f32 %v1368, %v1370
    %v1821 = vadd.f32 %v1369, %v1371
    %v1822 = vadd.f32 %v1794, %v1346
    %v1823 = vadd.f32 %v1795, %v1347
    %v1824 = vadd.f32 %v1796, %v1348
    %v1825 = vadd.f32 %v1797, %v1349
    %v1826 = vadd.f32 %v1798, %v1350
    %v1827 = vadd.f32 %v1799, %v1351
    %v1828 = vadd.f32 %v1800, %v1352
    %v1829 = vadd.f32 %v1801, %v1353
    %v1830 = vadd.f32 %v1802, %v1354
    %v1831 = vadd.f32 %v1803, %v1355
    %v1832 = vadd.f32 %v1804, %v1356
    %v1833 = vadd.f32 %v1805, %v1357
    %v1834 = vadd.f32 %v1806, %v1358
    %v1835 = vadd.f32 %v1807, %v1359
    %v1836 = vadd.f32 %v1808, %v1360
    %v1837 = vadd.f32 %v1809, %v1361
    %v1838 = vadd.f32 %v1810, %v1362
    %v1839 = vadd.f32 %v1811, %v1363
    %v1840 = vadd.f32 %v1812, %v1364
    %v1841 = vadd.f32 %v1813, %v1365
    %v1842 = vadd.f32 %v1814, %v1366
    %v1843 = vadd.f32 %v1815, %v1367
    %v1844 = vadd.f32 %v1816, %v1368
    %v1845 = vadd.f32 %v1817, %v1369
    %v1846 = vadd.f32 %v1818, %v1370
    %v1847 = vadd.f32 %v1819, %v1371
    %v1848 = vadd.f32 %v1820, %v1372
    %v1849 = vadd.f32 %v1821, %v1373
    %v1850 = vmul.f32 %v1822, 0.125
    %v1851 = vmul.f32 %v1823, 0.125
    %v1852 = vmul.f32 %v1824, 0.125
    %v1853 = vmul.f32 %v1825, 0.125
    %v1854 = vmul.f32 %v1826, 0.125
    %v1855 = vmul.f32 %v1827, 0.125
    %v1856 = vmul.f32 %v1828, 0.125
    %v1857 = vmul.f32 %v1829, 0.125
    %v1858 = vmul.f32 %v1830, 0.125
    %v1859 = vmul.f32 %v1831, 0.125
    %v1860 = vmul.f32 %v1832, 0.125
    %v1861 = vmul.f32 %v1833, 0.125
    %v1862 = vmul.f32 %v1834, 0.125
    %v1863 = vmul.f32 %v1835, 0.125
    %v1864 = vmul.f32 %v1836, 0.125
    %v1865 = vmul.f32 %v1837, 0.125
    %v1866 = vmul.f32 %v1838, 0.125
    %v1867 = vmul.f32 %v1839, 0.125
    %v1868 = vmul.f32 %v1840, 0.125
    %v1869 = vmul.f32 %v1841, 0.125
    %v1870 = vmul.f32 %v1842, 0.125
    %v1871 = vmul.f32 %v1843, 0.125
    %v1872 = vmul.f32 %v1844, 0.125
    %v1873 = vmul.f32 %v1845, 0.125
    %v1874 = vmul.f32 %v1846, 0.125
    %v1875 = vmul.f32 %v1847, 0.125
    %v1876 = vmul.f32 %v1848, 0.125
    %v1877 = vmul.f32 %v1849, 0.125
    %v1878 = vmul.f32 %v1626, %v1626
    %v1879 = vmul.f32 %v1627, %v1627
    %v1880 = vmul.f32 %v1628, %v1628
    %v1881 = vmul.f32 %v1629, %v1629
    %v1882 = vmul.f32 %v1630, %v1630
    %v1883 = vmul.f32 %v1631, %v1631
    %v1884 = vmul.f32 %v1632, %v1632
    %v1885 = vmul.f32 %v1633, %v1633
    %v1886 = vmul.f32 %v1634, %v1634
    %v1887 = vmul.f32 %v1635, %v1635
    %v1888 = vmul.f32 %v1636, %v1636
    %v1889 = vmul.f32 %v1637, %v1637
    %v1890 = vmul.f32 %v1638, %v1638
    %v1891 = vmul.f32 %v1639, %v1639
    %v1892 = vmul.f32 %v1640, %v1640
    %v1893 = vmul.f32 %v1641, %v1641
    %v1894 = vmul.f32 %v1642, %v1642
    %v1895 = vmul.f32 %v1643, %v1643
    %v1896 = vmul.f32 %v1644, %v1644
    %v1897 = vmul.f32 %v1645, %v1645
    %v1898 = vmul.f32 %v1646, %v1646
    %v1899 = vmul.f32 %v1647, %v1647
    %v1900 = vmul.f32 %v1648, %v1648
    %v1901 = vmul.f32 %v1649, %v1649
    %v1902 = vmul.f32 %v1650, %v1650
    %v1903 = vmul.f32 %v1651, %v1651
    %v1904 = vmul.f32 %v1652, %v1652
    %v1905 = vmul.f32 %v1653, %v1653
    %v1906 = vsub.f32 %v1850, %v1878
    %v1907 = vsub.f32 %v1851, %v1879
    %v1908 = vsub.f32 %v1852, %v1880
    %v1909 = vsub.f32 %v1853, %v1881
    %v1910 = vsub.f32 %v1854, %v1882
    %v1911 = vsub.f32 %v1855, %v1883
    %v1912 = vsub.f32 %v1856, %v1884
    %v1913 = vsub.f32 %v1857, %v1885
    %v1914 = vsub.f32 %v1858, %v1886
    %v1915 = vsub.f32 %v1859, %v1887
    %v1916 = vsub.f32 %v1860, %v1888
    %v1917 = vsub.f32 %v1861, %v1889
    %v1918 = vsub.f32 %v1862, %v1890
    %v1919 = vsub.f32 %v1863, %v1891
    %v1920 = vsub.f32 %v1864, %v1892
    %v1921 = vsub.f32 %v1865, %v1893
    %v1922 = vsub.f32 %v1866, %v1894
    %v1923 = vsub.f32 %v1867, %v1895
    %v1924 = vsub.f32 %v1868, %v1896
    %v1925 = vsub.f32 %v1869, %v1897
    %v1926 = vsub.f32 %v1870, %v1898
    %v1927 = vsub.f32 %v1871, %v1899
    %v1928 = vsub.f32 %v1872, %v1900
    %v1929 = vsub.f32 %v1873, %v1901
    %v1930 = vsub.f32 %v1874, %v1902
    %v1931 = vsub.f32 %v1875, %v1903
    %v1932 = vsub.f32 %v1876, %v1904
    %v1933 = vsub.f32 %v1877, %v1905
    %v1934 = vadd.f32 %v1454, %v1456
    %v1935 = vadd.f32 %v1455, %v1457
    %v1936 = vadd.f32 %v1456, %v1458
    %v1937 = vadd.f32 %v1457, %v1459
    %v1938 = vadd.f32 %v1458, %v1460
    %v1939 = vadd.f32 %v1459, %v1461
    %v1940 = vadd.f32 %v1460, %v1462
    %v1941 = vadd.f32 %v1461, %v1463
    %v1942 = vadd.f32 %v1462, %v1464
    %v1943 = vadd.f32 %v1463, %v1465
    %v1944 = vadd.f32 %v1464, %v1466
    %v1945 = vadd.f32 %v1465, %v1467
    %v1946 = vadd.f32 %v1466, %v1468
    %v1947 = vadd.f32 %v1467, %v1469
    %v1948 = vadd.f32 %v1468, %v1470
    %v1949 = vadd.f32 %v1469, %v1471
    %v1950 = vadd.f32 %v1470, %v1472
    %v1951 = vadd.f32 %v1471, %v1473
    %v1952 = vadd.f32 %v1472, %v1474
    %v1953 = vadd.f32 %v1473, %v1475
    %v1954 = vadd.f32 %v1474, %v1476
    %v1955 = vadd.f32 %v1475, %v1477
    %v1956 = vadd.f32 %v1476, %v1478
    %v1957 = vadd.f32 %v1477, %v1479
    %v1958 = vadd.f32 %v1478, %v1480
    %v1959 = vadd.f32 %v1479, %v1481
    %v1960 = vadd.f32 %v1480, %v1482
    %v1961 = vadd.f32 %v1481, %v1483
    %v1962 = vadd.f32 %v1934, %v1458
    %v1963 = vadd.f32 %v1935, %v1459
    %v1964 = vadd.f32 %v1936, %v1460
    %v1965 = vadd.f32 %v1937, %v1461
    %v1966 = vadd.f32 %v1938, %v1462
    %v1967 = vadd.f32 %v1939, %v1463
    %v1968 = vadd.f32 %v1940, %v1464
    %v1969 = vadd.f32 %v1941, %v1465
    %v1970 = vadd.f32 %v1942, %v1466
    %v1971 = vadd.f32 %v1943, %v1467
    %v1972 = vadd.f32 %v1944, %v1468
    %v1973 = vadd.f32 %v1945, %v1469
    %v1974 = vadd.f32 %v1946, %v1470
    %v1975 = vadd.f32 %v1947, %v1471
    %v1976 = vadd.f32 %v1948, %v1472
    %v1977 = vadd.f32 %v1949, %v1473
    %v1978 = vadd.f32 %v1950, %v1474
    %v1979 = vadd.f32 %v1951, %v1475
    %v1980 = vadd.f32 %v1952, %v1476
    %v1981 = vadd.f32 %v1953, %v1477
    %v1982 = vadd.f32 %v1954, %v1478
    %v1983 = vadd.f32 %v1955, %v1479
    %v1984 = vadd.f32 %v1956, %v1480
    %v1985 = vadd.f32 %v1957, %v1481
    %v1986 = vadd.f32 %v1958, %v1482
    %v1987 = vadd.f32 %v1959, %v1483
    %v1988 = vadd.f32 %v1960, %v1484
    %v1989 = vadd.f32 %v1961, %v1485
    %v1990 = vmul.f32 %v1962, 0.125
    %v1991 = vmul.f32 %v1963, 0.125
    %v1992 = vmul.f32 %v1964, 0.125
    %v1993 = vmul.f32 %v1965, 0.125
    %v1994 = vmul.f32 %v1966, 0.125
    %v1995 = vmul.f32 %v1967, 0.125
    %v1996 = vmul.f32 %v1968, 0.125
    %v1997 = vmul.f32 %v1969, 0.125
    %v1998 = vmul.f32 %v1970, 0.125
    %v1999 = vmul.f32 %v1971, 0.125
    %v2000 = vmul.f32 %v1972, 0.125
    %v2001 = vmul.f32 %v1973, 0.125
    %v2002 = vmul.f32 %v1974, 0.125
    %v2003 = vmul.f32 %v1975, 0.125
    %v2004 = vmul.f32 %v1976, 0.125
    %v2005 = vmul.f32 %v1977, 0.125
    %v2006 = vmul.f32 %v1978, 0.125
    %v2007 = vmul.f32 %v1979, 0.125
    %v2008 = vmul.f32 %v1980, 0.125
    %v2009 = vmul.f32 %v1981, 0.125
    %v2010 = vmul.f32 %v1982, 0.125
    %v2011 = vmul.f32 %v1983, 0.125
    %v2012 = vmul.f32 %v1984, 0.125
    %v2013 = vmul.f32 %v1985, 0.125
    %v2014 = vmul.f32 %v1986, 0.125
    %v2015 = vmul.f32 %v1987, 0.125
    %v2016 = vmul.f32 %v1988, 0.125
    %v2017 = vmul.f32 %v1989, 0.125
    %v2018 = vmul.f32 %v1542, %v1626
    %v2019 = vmul.f32 %v1543, %v1627
    %v2020 = vmul.f32 %v1544, %v1628
    %v2021 = vmul.f32 %v1545, %v1629
    %v2022 = vmul.f32 %v1546, %v1630
    %v2023 = vmul.f32 %v1547, %v1631
    %v2024 = vmul.f32 %v1548, %v1632
    %v2025 = vmul.f32 %v1549, %v1633
    %v2026 = vmul.f32 %v1550, %v1634
    %v2027 = vmul.f32 %v1551, %v1635
    %v2028 = vmul.f32 %v1552, %v1636
    %v2029 = vmul.f32 %v1553, %v1637
    %v2030 = vmul.f32 %v1554, %v1638
    %v2031 = vmul.f32 %v1555, %v1639
    %v2032 = vmul.f32 %v1556, %v1640
    %v2033 = vmul.f32 %v1557, %v1641
    %v2034 = vmul.f32 %v1558, %v1642
    %v2035 = vmul.f32 %v1559, %v1643
    %v2036 = vmul.f32 %v1560, %v1644
    %v2037 = vmul.f32 %v1561, %v1645
    %v2038 = vmul.f32 %v1562, %v1646
    %v2039 = vmul.f32 %v1563, %v1647
    %v2040 = vmul.f32 %v1564, %v1648
    %v2041 = vmul.f32 %v1565, %v1649
    %v2042 = vmul.f32 %v1566, %v1650
    %v2043 = vmul.f32 %v1567, %v1651
    %v2044 = vmul.f32 %v1568, %v1652
    %v2045 = vmul.f32 %v1569, %v1653
    %v2046 = vsub.f32 %v1990, %v2018
    %v2047 = vsub.f32 %v1991, %v2019
    %v2048 = vsub.f32 %v1992, %v2020
    %v2049 = vsub.f32 %v1993, %v2021
    %v2050 = vsub.f32 %v1994, %v2022
    %v2051 = vsub.f32 %v1995, %v2023
    %v2052 = vsub.f32 %v1996, %v2024
    %v2053 = vsub.f32 %v1997, %v2025
    %v2054 = vsub.f32 %v1998, %v2026
    %v2055 = vsub.f32 %v1999, %v2027
    %v2056 = vsub.f32 %v2000, %v2028
    %v2057 = vsub.f32 %v2001, %v2029
    %v2058 = vsub.f32 %v2002, %v2030
    %v2059 = vsub.f32 %v2003, %v2031
    %v2060 = vsub.f32 %v2004, %v2032
    %v2061 = vsub.f32 %v2005, %v2033
    %v2062 = vsub.f32 %v2006, %v2034
    %v2063 = vsub.f32 %v2007, %v2035
    %v2064 = vsub.f32 %v2008, %v2036
    %v2065 = vsub.f32 %v2009, %v2037
    %v2066 = vsub.f32 %v2010, %v2038
    %v2067 = vsub.f32 %v2011, %v2039
    %v2068 = vsub.f32 %v2012, %v2040
    %v2069 = vsub.f32 %v2013, %v2041
    %v2070 = vsub.f32 %v2014, %v2042
    %v2071 = vsub.f32 %v2015, %v2043
    %v2072 = vsub.f32 %v2016, %v2044
    %v2073 = vsub.f32 %v2017, %v2045
    %v2074 = vmul.f32 %v1542, 2.0
    %v2075 = vmul.f32 %v1543, 2.0
    %v2076 = vmul.f32 %v1544, 2.0
    %v2077 = vmul.f32 %v1545, 2.0
    %v2078 = vmul.f32 %v1546, 2.0
    %v2079 = vmul.f32 %v1547, 2.0
    %v2080 = vmul.f32 %v1548, 2.0
    %v2081 = vmul.f32 %v1549, 2.0
    %v2082 = vmul.f32 %v1550, 2.0
    %v2083 = vmul.f32 %v1551, 2.0
    %v2084 = vmul.f32 %v1552, 2.0
    %v2085 = vmul.f32 %v1553, 2.0
    %v2086 = vmul.f32 %v1554, 2.0
    %v2087 = vmul.f32 %v1555, 2.0
    %v2088 = vmul.f32 %v1556, 2.0
    %v2089 = vmul.f32 %v1557, 2.0
    %v2090 = vmul.f32 %v1558, 2.0
    %v2091 = vmul.f32 %v1559, 2.0
    %v2092 = vmul.f32 %v1560, 2.0
    %v2093 = vmul.f32 %v1561, 2.0
    %v2094 = vmul.f32 %v1562, 2.0
    %v2095 = vmul.f32 %v1563, 2.0
    %v2096 = vmul.f32 %v1564, 2.0
    %v2097 = vmul.f32 %v1565, 2.0
    %v2098 = vmul.f32 %v1566, 2.0
    %v2099 = vmul.f32 %v1567, 2.0
    %v2100 = vmul.f32 %v1568, 2.0
    %v2101 = vmul.f32 %v1569, 2.0
    %v2102 = vmul.f32 %v2074, %v1626
    %v2103 = vmul.f32 %v2075, %v1627
    %v2104 = vmul.f32 %v2076, %v1628
    %v2105 = vmul.f32 %v2077, %v1629
    %v2106 = vmul.f32 %v2078, %v1630
    %v2107 = vmul.f32 %v2079, %v1631
    %v2108 = vmul.f32 %v2080, %v1632
    %v2109 = vmul.f32 %v2081, %v1633
    %v2110 = vmul.f32 %v2082, %v1634
    %v2111 = vmul.f32 %v2083, %v1635
    %v2112 = vmul.f32 %v2084, %v1636
    %v2113 = vmul.f32 %v2085, %v1637
    %v2114 = vmul.f32 %v2086, %v1638
    %v2115 = vmul.f32 %v2087, %v1639
    %v2116 = vmul.f32 %v2088, %v1640
    %v2117 = vmul.f32 %v2089, %v1641
    %v2118 = vmul.f32 %v2090, %v1642
    %v2119 = vmul.f32 %v2091, %v1643
    %v2120 = vmul.f32 %v2092, %v1644
    %v2121 = vmul.f32 %v2093, %v1645
    %v2122 = vmul.f32 %v2094, %v1646
    %v2123 = vmul.f32 %v2095, %v1647
    %v2124 = vmul.f32 %v2096, %v1648
    %v2125 = vmul.f32 %v2097, %v1649
    %v2126 = vmul.f32 %v2098, %v1650
    %v2127 = vmul.f32 %v2099, %v1651
    %v2128 = vmul.f32 %v2100, %v1652
    %v2129 = vmul.f32 %v2101, %v1653
    %v2130 = vadd.f32 %v2102, 0.0001
    %v2131 = vadd.f32 %v2103, 0.0001
    %v2132 = vadd.f32 %v2104, 0.0001
    %v2133 = vadd.f32 %v2105, 0.0001
    %v2134 = vadd.f32 %v2106, 0.0001
    %v2135 = vadd.f32 %v2107, 0.0001
    %v2136 = vadd.f32 %v2108, 0.0001
    %v2137 = vadd.f32 %v2109, 0.0001
    %v2138 = vadd.f32 %v2110, 0.0001
    %v2139 = vadd.f32 %v2111, 0.0001
    %v2140 = vadd.f32 %v2112, 0.0001
    %v2141 = vadd.f32 %v2113, 0.0001
    %v2142 = vadd.f32 %v2114, 0.0001
    %v2143 = vadd.f32 %v2115, 0.0001
    %v2144 = vadd.f32 %v2116, 0.0001
    %v2145 = vadd.f32 %v2117, 0.0001
    %v2146 = vadd.f32 %v2118, 0.0001
    %v2147 = vadd.f32 %v2119, 0.0001
    %v2148 = vadd.f32 %v2120, 0.0001
    %v2149 = vadd.f32 %v2121, 0.0001
    %v2150 = vadd.f32 %v2122, 0.0001
    %v2151 = vadd.f32 %v2123, 0.0001
    %v2152 = vadd.f32 %v2124, 0.0001
    %v2153 = vadd.f32 %v2125, 0.0001
    %v2154 = vadd.f32 %v2126, 0.0001
    %v2155 = vadd.f32 %v2127, 0.0001
    %v2156 = vadd.f32 %v2128, 0.0001
    %v2157 = vadd.f32 %v2129, 0.0001
    %v2158 = vmul.f32 %v2046, 2.0
    %v2159 = vmul.f32 %v2047, 2.0
    %v2160 = vmul.f32 %v2048, 2.0
    %v2161 = vmul.f32 %v2049, 2.0
    %v2162 = vmul.f32 %v2050, 2.0
    %v2163 = vmul.f32 %v2051, 2.0
    %v2164 = vmul.f32 %v2052, 2.0
    %v2165 = vmul.f32 %v2053, 2.0
    %v2166 = vmul.f32 %v2054, 2.0
    %v2167 = vmul.f32 %v2055, 2.0
    %v2168 = vmul.f32 %v2056, 2.0
    %v2169 = vmul.f32 %v2057, 2.0
    %v2170 = vmul.f32 %v2058, 2.0
    %v2171 = vmul.f32 %v2059, 2.0
    %v2172 = vmul.f32 %v2060, 2.0
    %v2173 = vmul.f32 %v2061, 2.0
    %v2174 = vmul.f32 %v2062, 2.0
    %v2175 = vmul.f32 %v2063, 2.0
    %v2176 = vmul.f32 %v2064, 2.0
    %v2177 = vmul.f32 %v2065, 2.0
    %v2178 = vmul.f32 %v2066, 2.0
    %v2179 = vmul.f32 %v2067, 2.0
    %v2180 = vmul.f32 %v2068, 2.0
    %v2181 = vmul.f32 %v2069, 2.0
    %v2182 = vmul.f32 %v2070, 2.0
    %v2183 = vmul.f32 %v2071, 2.0
    %v2184 = vmul.f32 %v2072, 2.0
    %v2185 = vmul.f32 %v2073, 2.0
    %v2186 = vadd.f32 %v2158, 0.0009
    %v2187 = vadd.f32 %v2159, 0.0009
    %v2188 = vadd.f32 %v2160, 0.0009
    %v2189 = vadd.f32 %v2161, 0.0009
    %v2190 = vadd.f32 %v2162, 0.0009
    %v2191 = vadd.f32 %v2163, 0.0009
    %v2192 = vadd.f32 %v2164, 0.0009
    %v2193 = vadd.f32 %v2165, 0.0009
    %v2194 = vadd.f32 %v2166, 0.0009
    %v2195 = vadd.f32 %v2167, 0.0009
    %v2196 = vadd.f32 %v2168, 0.0009
    %v2197 = vadd.f32 %v2169, 0.0009
    %v2198 = vadd.f32 %v2170, 0.0009
    %v2199 = vadd.f32 %v2171, 0.0009
    %v2200 = vadd.f32 %v2172, 0.0009
    %v2201 = vadd.f32 %v2173, 0.0009
    %v2202 = vadd.f32 %v2174, 0.0009
    %v2203 = vadd.f32 %v2175, 0.0009
    %v2204 = vadd.f32 %v2176, 0.0009
    %v2205 = vadd.f32 %v2177, 0.0009
    %v2206 = vadd.f32 %v2178, 0.0009
    %v2207 = vadd.f32 %v2179, 0.0009
    %v2208 = vadd.f32 %v2180, 0.0009
    %v2209 = vadd.f32 %v2181, 0.0009
    %v2210 = vadd.f32 %v2182, 0.0009
    %v2211 = vadd.f32 %v2183, 0.0009
    %v2212 = vadd.f32 %v2184, 0.0009
    %v2213 = vadd.f32 %v2185, 0.0009
    %v2214 = vmul.f32 %v2130, %v2186
    %v2215 = vmul.f32 %v2131, %v2187
    %v2216 = vmul.f32 %v2132, %v2188
    %v2217 = vmul.f32 %v2133, %v2189
    %v2218 = vmul.f32 %v2134, %v2190
    %v2219 = vmul.f32 %v2135, %v2191
    %v2220 = vmul.f32 %v2136, %v2192
    %v2221 = vmul.f32 %v2137, %v2193
    %v2222 = vmul.f32 %v2138, %v2194
    %v2223 = vmul.f32 %v2139, %v2195
    %v2224 = vmul.f32 %v2140, %v2196
    %v2225 = vmul.f32 %v2141, %v2197
    %v2226 = vmul.f32 %v2142, %v2198
    %v2227 = vmul.f32 %v2143, %v2199
    %v2228 = vmul.f32 %v2144, %v2200
    %v2229 = vmul.f32 %v2145, %v2201
    %v2230 = vmul.f32 %v2146, %v2202
    %v2231 = vmul.f32 %v2147, %v2203
    %v2232 = vmul.f32 %v2148, %v2204
    %v2233 = vmul.f32 %v2149, %v2205
    %v2234 = vmul.f32 %v2150, %v2206
    %v2235 = vmul.f32 %v2151, %v2207
    %v2236 = vmul.f32 %v2152, %v2208
    %v2237 = vmul.f32 %v2153, %v2209
    %v2238 = vmul.f32 %v2154, %v2210
    %v2239 = vmul.f32 %v2155, %v2211
    %v2240 = vmul.f32 %v2156, %v2212
    %v2241 = vmul.f32 %v2157, %v2213
    %v2242 = vadd.f32 %v1738, %v1878
    %v2243 = vadd.f32 %v1739, %v1879
    %v2244 = vadd.f32 %v1740, %v1880
    %v2245 = vadd.f32 %v1741, %v1881
    %v2246 = vadd.f32 %v1742, %v1882
    %v2247 = vadd.f32 %v1743, %v1883
    %v2248 = vadd.f32 %v1744, %v1884
    %v2249 = vadd.f32 %v1745, %v1885
    %v2250 = vadd.f32 %v1746, %v1886
    %v2251 = vadd.f32 %v1747, %v1887
    %v2252 = vadd.f32 %v1748, %v1888
    %v2253 = vadd.f32 %v1749, %v1889
    %v2254 = vadd.f32 %v1750, %v1890
    %v2255 = vadd.f32 %v1751, %v1891
    %v2256 = vadd.f32 %v1752, %v1892
    %v2257 = vadd.f32 %v1753, %v1893
    %v2258 = vadd.f32 %v1754, %v1894
    %v2259 = vadd.f32 %v1755, %v1895
    %v2260 = vadd.f32 %v1756, %v1896
    %v2261 = vadd.f32 %v1757, %v1897
    %v2262 = vadd.f32 %v1758, %v1898
    %v2263 = vadd.f32 %v1759, %v1899
    %v2264 = vadd.f32 %v1760, %v1900
    %v2265 = vadd.f32 %v1761, %v1901
    %v2266 = vadd.f32 %v1762, %v1902
    %v2267 = vadd.f32 %v1763, %v1903
    %v2268 = vadd.f32 %v1764, %v1904
    %v2269 = vadd.f32 %v1765, %v1905
    %v2270 = vadd.f32 %v2242, 0.0001
    %v2271 = vadd.f32 %v2243, 0.0001
    %v2272 = vadd.f32 %v2244, 0.0001
    %v2273 = vadd.f32 %v2245, 0.0001
    %v2274 = vadd.f32 %v2246, 0.0001
    %v2275 = vadd.f32 %v2247, 0.0001
    %v2276 = vadd.f32 %v2248, 0.0001
    %v2277 = vadd.f32 %v2249, 0.0001
    %v2278 = vadd.f32 %v2250, 0.0001
    %v2279 = vadd.f32 %v2251, 0.0001
    %v2280 = vadd.f32 %v2252, 0.0001
    %v2281 = vadd.f32 %v2253, 0.0001
    %v2282 = vadd.f32 %v2254, 0.0001
    %v2283 = vadd.f32 %v2255, 0.0001
    %v2284 = vadd.f32 %v2256, 0.0001
    %v2285 = vadd.f32 %v2257, 0.0001
    %v2286 = vadd.f32 %v2258, 0.0001
    %v2287 = vadd.f32 %v2259, 0.0001
    %v2288 = vadd.f32 %v2260, 0.0001
    %v2289 = vadd.f32 %v2261, 0.0001
    %v2290 = vadd.f32 %v2262, 0.0001
    %v2291 = vadd.f32 %v2263, 0.0001
    %v2292 = vadd.f32 %v2264, 0.0001
    %v2293 = vadd.f32 %v2265, 0.0001
    %v2294 = vadd.f32 %v2266, 0.0001
    %v2295 = vadd.f32 %v2267, 0.0001
    %v2296 = vadd.f32 %v2268, 0.0001
    %v2297 = vadd.f32 %v2269, 0.0001
    %v2298 = vadd.f32 %v1766, %v1906
    %v2299 = vadd.f32 %v1767, %v1907
    %v2300 = vadd.f32 %v1768, %v1908
    %v2301 = vadd.f32 %v1769, %v1909
    %v2302 = vadd.f32 %v1770, %v1910
    %v2303 = vadd.f32 %v1771, %v1911
    %v2304 = vadd.f32 %v1772, %v1912
    %v2305 = vadd.f32 %v1773, %v1913
    %v2306 = vadd.f32 %v1774, %v1914
    %v2307 = vadd.f32 %v1775, %v1915
    %v2308 = vadd.f32 %v1776, %v1916
    %v2309 = vadd.f32 %v1777, %v1917
    %v2310 = vadd.f32 %v1778, %v1918
    %v2311 = vadd.f32 %v1779, %v1919
    %v2312 = vadd.f32 %v1780, %v1920
    %v2313 = vadd.f32 %v1781, %v1921
    %v2314 = vadd.f32 %v1782, %v1922
    %v2315 = vadd.f32 %v1783, %v1923
    %v2316 = vadd.f32 %v1784, %v1924
    %v2317 = vadd.f32 %v1785, %v1925
    %v2318 = vadd.f32 %v1786, %v1926
    %v2319 = vadd.f32 %v1787, %v1927
    %v2320 = vadd.f32 %v1788, %v1928
    %v2321 = vadd.f32 %v1789, %v1929
    %v2322 = vadd.f32 %v1790, %v1930
    %v2323 = vadd.f32 %v1791, %v1931
    %v2324 = vadd.f32 %v1792, %v1932
    %v2325 = vadd.f32 %v1793, %v1933
    %v2326 = vadd.f32 %v2298, 0.0009
    %v2327 = vadd.f32 %v2299, 0.0009
    %v2328 = vadd.f32 %v2300, 0.0009
    %v2329 = vadd.f32 %v2301, 0.0009
    %v2330 = vadd.f32 %v2302, 0.0009
    %v2331 = vadd.f32 %v2303, 0.0009
    %v2332 = vadd.f32 %v2304, 0.0009
    %v2333 = vadd.f32 %v2305, 0.0009
    %v2334 = vadd.f32 %v2306, 0.0009
    %v2335 = vadd.f32 %v2307, 0.0009
    %v2336 = vadd.f32 %v2308, 0.0009
    %v2337 = vadd.f32 %v2309, 0.0009
    %v2338 = vadd.f32 %v2310, 0.0009
    %v2339 = vadd.f32 %v2311, 0.0009
    %v2340 = vadd.f32 %v2312, 0.0009
    %v2341 = vadd.f32 %v2313, 0.0009
    %v2342 = vadd.f32 %v2314, 0.0009
    %v2343 = vadd.f32 %v2315, 0.0009
    %v2344 = vadd.f32 %v2316, 0.0009
    %v2345 = vadd.f32 %v2317, 0.0009
    %v2346 = vadd.f32 %v2318, 0.0009
    %v2347 = vadd.f32 %v2319, 0.0009
    %v2348 = vadd.f32 %v2320, 0.0009
    %v2349 = vadd.f32 %v2321, 0.0009
    %v2350 = vadd.f32 %v2322, 0.0009
    %v2351 = vadd.f32 %v2323, 0.0009
    %v2352 = vadd.f32 %v2324, 0.0009
    %v2353 = vadd.f32 %v2325, 0.0009
    %v2354 = vmul.f32 %v2270, %v2326
    %v2355 = vmul.f32 %v2271, %v2327
    %v2356 = vmul.f32 %v2272, %v2328
    %v2357 = vmul.f32 %v2273, %v2329
    %v2358 = vmul.f32 %v2274, %v2330
    %v2359 = vmul.f32 %v2275, %v2331
    %v2360 = vmul.f32 %v2276, %v2332
    %v2361 = vmul.f32 %v2277, %v2333
    %v2362 = vmul.f32 %v2278, %v2334
    %v2363 = vmul.f32 %v2279, %v2335
    %v2364 = vmul.f32 %v2280, %v2336
    %v2365 = vmul.f32 %v2281, %v2337
    %v2366 = vmul.f32 %v2282, %v2338
    %v2367 = vmul.f32 %v2283, %v2339
    %v2368 = vmul.f32 %v2284, %v2340
    %v2369 = vmul.f32 %v2285, %v2341
    %v2370 = vmul.f32 %v2286, %v2342
    %v2371 = vmul.f32 %v2287, %v2343
    %v2372 = vmul.f32 %v2288, %v2344
    %v2373 = vmul.f32 %v2289, %v2345
    %v2374 = vmul.f32 %v2290, %v2346
    %v2375 = vmul.f32 %v2291, %v2347
    %v2376 = vmul.f32 %v2292, %v2348
    %v2377 = vmul.f32 %v2293, %v2349
    %v2378 = vmul.f32 %v2294, %v2350
    %v2379 = vmul.f32 %v2295, %v2351
    %v2380 = vmul.f32 %v2296, %v2352
    %v2381 = vmul.f32 %v2297, %v2353
    %v2382 = vrcp.pop %v2354
    %v2383 = vrcp.pop %v2355
    %v2384 = vrcp.pop %v2356
    %v2385 = vrcp.pop %v2357
    %v2386 = vrcp.pop %v2358
    %v2387 = vrcp.pop %v2359
    %v2388 = vrcp.pop %v2360
    %v2389 = vrcp.pop %v2361
    %v2390 = vrcp.pop %v2362
    %v2391 = vrcp.pop %v2363
    %v2392 = vrcp.pop %v2364
    %v2393 = vrcp.pop %v2365
    %v2394 = vrcp.pop %v2366
    %v2395 = vrcp.pop %v2367
    %v2396 = vrcp.pop %v2368
    %v2397 = vrcp.pop %v2369
    %v2398 = vrcp.pop %v2370
    %v2399 = vrcp.pop %v2371
    %v2400 = vrcp.pop %v2372
    %v2401 = vrcp.pop %v2373
    %v2402 = vrcp.pop %v2374
    %v2403 = vrcp.pop %v2375
    %v2404 = vrcp.pop %v2376
    %v2405 = vrcp.pop %v2377
    %v2406 = vrcp.pop %v2378
    %v2407 = vrcp.pop %v2379
    %v2408 = vrcp.pop %v2380
    %v2409 = vrcp.pop %v2381
    %v2410 = vmul.f32 %v2354, %v2382
    %v2411 = vmul.f32 %v2355, %v2383
    %v2412 = vmul.f32 %v2356, %v2384
    %v2413 = vmul.f32 %v2357, %v2385
    %v2414 = vmul.f32 %v2358, %v2386
    %v2415 = vmul.f32 %v2359, %v2387
    %v2416 = vmul.f32 %v2360, %v2388
    %v2417 = vmul.f32 %v2361, %v2389
    %v2418 = vmul.f32 %v2362, %v2390
    %v2419 = vmul.f32 %v2363, %v2391
    %v2420 = vmul.f32 %v2364, %v2392
    %v2421 = vmul.f32 %v2365, %v2393
    %v2422 = vmul.f32 %v2366, %v2394
    %v2423 = vmul.f32 %v2367, %v2395
    %v2424 = vmul.f32 %v2368, %v2396
    %v2425 = vmul.f32 %v2369, %v2397
    %v2426 = vmul.f32 %v2370, %v2398
    %v2427 = vmul.f32 %v2371, %v2399
    %v2428 = vmul.f32 %v2372, %v2400
    %v2429 = vmul.f32 %v2373, %v2401
    %v2430 = vmul.f32 %v2374, %v2402
    %v2431 = vmul.f32 %v2375, %v2403
    %v2432 = vmul.f32 %v2376, %v2404
    %v2433 = vmul.f32 %v2377, %v2405
    %v2434 = vmul.f32 %v2378, %v2406
    %v2435 = vmul.f32 %v2379, %v2407
    %v2436 = vmul.f32 %v2380, %v2408
    %v2437 = vmul.f32 %v2381, %v2409
    %v2438 = vsub.f32 2.0, %v2410
    %v2439 = vsub.f32 2.0, %v2411
    %v2440 = vsub.f32 2.0, %v2412
    %v2441 = vsub.f32 2.0, %v2413
    %v2442 = vsub.f32 2.0, %v2414
    %v2443 = vsub.f32 2.0, %v2415
    %v2444 = vsub.f32 2.0, %v2416
    %v2445 = vsub.f32 2.0, %v2417
    %v2446 = vsub.f32 2.0, %v2418
    %v2447 = vsub.f32 2.0, %v2419
    %v2448 = vsub.f32 2.0, %v2420
    %v2449 = vsub.f32 2.0, %v2421
    %v2450 = vsub.f32 2.0, %v2422
    %v2451 = vsub.f32 2.0, %v2423
    %v2452 = vsub.f32 2.0, %v2424
    %v2453 = vsub.f32 2.0, %v2425
    %v2454 = vsub.f32 2.0, %v2426
    %v2455 = vsub.f32 2.0, %v2427
    %v2456 = vsub.f32 2.0, %v2428
    %v2457 = vsub.f32 2.0, %v2429
    %v2458 = vsub.f32 2.0, %v2430
    %v2459 = vsub.f32 2.0, %v2431
    %v2460 = vsub.f32 2.0, %v2432
    %v2461 = vsub.f32 2.0, %v2433
    %v2462 = vsub.f32 2.0, %v2434
    %v2463 = vsub.f32 2.0, %v2435
    %v2464 = vsub.f32 2.0, %v2436
    %v2465 = vsub.f32 2.0, %v2437
    %v2466 = vmul.f32 %v2382, %v2438
    %v2467 = vmul.f32 %v2383, %v2439
    %v2468 = vmul.f32 %v2384, %v2440
    %v2469 = vmul.f32 %v2385, %v2441
    %v2470 = vmul.f32 %v2386, %v2442
    %v2471 = vmul.f32 %v2387, %v2443
    %v2472 = vmul.f32 %v2388, %v2444
    %v2473 = vmul.f32 %v2389, %v2445
    %v2474 = vmul.f32 %v2390, %v2446
    %v2475 = vmul.f32 %v2391, %v2447
    %v2476 = vmul.f32 %v2392, %v2448
    %v2477 = vmul.f32 %v2393, %v2449
    %v2478 = vmul.f32 %v2394, %v2450
    %v2479 = vmul.f32 %v2395, %v2451
    %v2480 = vmul.f32 %v2396, %v2452
    %v2481 = vmul.f32 %v2397, %v2453
    %v2482 = vmul.f32 %v2398, %v2454
    %v2483 = vmul.f32 %v2399, %v2455
    %v2484 = vmul.f32 %v2400, %v2456
    %v2485 = vmul.f32 %v2401, %v2457
    %v2486 = vmul.f32 %v2402, %v2458
    %v2487 = vmul.f32 %v2403, %v2459
    %v2488 = vmul.f32 %v2404, %v2460
    %v2489 = vmul.f32 %v2405, %v2461
    %v2490 = vmul.f32 %v2406, %v2462
    %v2491 = vmul.f32 %v2407, %v2463
    %v2492 = vmul.f32 %v2408, %v2464
    %v2493 = vmul.f32 %v2409, %v2465
    %v2494 = vmul.f32 %v2214, %v2466
    %v2495 = vmul.f32 %v2215, %v2467
    %v2496 = vmul.f32 %v2216, %v2468
    %v2497 = vmul.f32 %v2217, %v2469
    %v2498 = vmul.f32 %v2218, %v2470
    %v2499 = vmul.f32 %v2219, %v2471
    %v2500 = vmul.f32 %v2220, %v2472
    %v2501 = vmul.f32 %v2221, %v2473
    %v2502 = vmul.f32 %v2222, %v2474
    %v2503 = vmul.f32 %v2223, %v2475
    %v2504 = vmul.f32 %v2224, %v2476
    %v2505 = vmul.f32 %v2225, %v2477
    %v2506 = vmul.f32 %v2226, %v2478
    %v2507 = vmul.f32 %v2227, %v2479
    %v2508 = vmul.f32 %v2228, %v2480
    %v2509 = vmul.f32 %v2229, %v2481
    %v2510 = vmul.f32 %v2230, %v2482
    %v2511 = vmul.f32 %v2231, %v2483
    %v2512 = vmul.f32 %v2232, %v2484
    %v2513 = vmul.f32 %v2233, %v2485
    %v2514 = vmul.f32 %v2234, %v2486
    %v2515 = vmul.f32 %v2235, %v2487
    %v2516 = vmul.f32 %v2236, %v2488
    %v2517 = vmul.f32 %v2237, %v2489
    %v2518 = vmul.f32 %v2238, %v2490
    %v2519 = vmul.f32 %v2239, %v2491
    %v2520 = vmul.f32 %v2240, %v2492
    %v2521 = vmul.f32 %v2241, %v2493
    %v2522 = vsub.f32 1.0, %v2494
    %v2523 = vsub.f32 1.0, %v2495
    %v2524 = vsub.f32 1.0, %v2496
    %v2525 = vsub.f32 1.0, %v2497
    %v2526 = vsub.f32 1.0, %v2498
    %v2527 = vsub.f32 1.0, %v2499
    %v2528 = vsub.f32 1.0, %v2500
    %v2529 = vsub.f32 1.0, %v2501
    %v2530 = vsub.f32 1.0, %v2502
    %v2531 = vsub.f32 1.0, %v2503
    %v2532 = vsub.f32 1.0, %v2504
    %v2533 = vsub.f32 1.0, %v2505
    %v2534 = vsub.f32 1.0, %v2506
    %v2535 = vsub.f32 1.0, %v2507
    %v2536 = vsub.f32 1.0, %v2508
    %v2537 = vsub.f32 1.0, %v2509
    %v2538 = vsub.f32 1.0, %v2510
    %v2539 = vsub.f32 1.0, %v2511
    %v2540 = vsub.f32 1.0, %v2512
    %v2541 = vsub.f32 1.0, %v2513
    %v2542 = vsub.f32 1.0, %v2514
    %v2543 = vsub.f32 1.0, %v2515
    %v2544 = vsub.f32 1.0, %v2516
    %v2545 = vsub.f32 1.0, %v2517
    %v2546 = vsub.f32 1.0, %v2518
    %v2547 = vsub.f32 1.0, %v2519
    %v2548 = vsub.f32 1.0, %v2520
    %v2549 = vsub.f32 1.0, %v2521
    %2550 = vst [vmem:[#allocation7] sm:$0xff] %v2522
    %2551 = vst [vmem:[#allocation7 + $0x8] sm:$0x3f] %v2523
    %2552 = vst [vmem:[#allocation7 + $0x10] sm:$0xff] %v2524
    %2553 = vst [vmem:[#allocation7 + $0x18] sm:$0x3f] %v2525
    %2554 = vst [vmem:[#allocation7 + $0x20] sm:$0xff] %v2526
    %2555 = vst [vmem:[#allocation7 + $0x28] sm:$0x3f] %v2527
    %2556 = vst [vmem:[#allocation7 + $0x30] sm:$0xff] %v2528
    %2557 = vst [vmem:[#allocation7 + $0x38] sm:$0x3f] %v2529
    %2558 = vst [vmem:[#allocation7 + $0x40] sm:$0xff] %v2530
    %2559 = vst [vmem:[#allocation7 + $0x48] sm:$0x3f] %v2531
    %2560 = vst [vmem:[#allocation7 + $0x50] sm:$0xff] %v2532
    %2561 = vst [vmem:[#allocation7 + $0x58] sm:$0x3f] %v2533
    %2562 = vst [vmem:[#allocation7 + $0x60] sm:$0xff] %v2534
    %2563 = vst [vmem:[#allocation7 + $0x68] sm:$0x3f] %v2535
    %2564 = vst [vmem:[#allocation7 + $0x70] sm:$0xff] %v2536
    %2565 = vst [vmem:[#allocation7 + $0x78] sm:$0x3f] %v2537
    %2566 = vst [vmem:[#allocation7 + $0x80] sm:$0xff] %v2538
    %2567 = vst [vmem:[#allocation7 + $0x88] sm:$0x3f] %v2539
    %2568 = vst [vmem:[#allocation7 + $0x90] sm:$0xff] %v2540
    %2569 = vst [vmem:[#allocation7 + $0x98] sm:$0x3f] %v2541
    %2570 = vst [vmem:[#allocation7 + $0xa0] sm:$0xff] %v2542
    %2571 = vst [vmem:[#allocation7 + $0xa8] sm:$0x3f] %v2543
    %2572 = vst [vmem:[#allocation7 + $0xb0] sm:$0xff] %v2544
    %2573 = vst [vmem:[#allocation7 + $0xb8] sm:$0x3f] %v2545
    %2574 = vst [vmem:[#allocation7 + $0xc0] sm:$0xff] %v2546
    %2575 = vst [vmem:[#allocation7 + $0xc8] sm:$0x3f] %v2547
    %2576 = vst [vmem:[#allocation7 + $0xd0] sm:$0xff] %v2548
    %2577 = vst [vmem:[#allocation7 + $0xd8] sm:$0x3f] %v2549
    %v2578 = vadd.f32 %v2522, %v2524
    %v2579 = vadd.f32 %v2578, %v2526
    %v2580 = vadd.f32 %v2579, %v2528
    %v2581 = vadd.f32 %v2580, %v2530
    %v2582 = vadd.f32 %v2581, %v2532
    %v2583 = vadd.f32 %v2582, %v2534
    %v2584 = vadd.f32 %v2583, %v2536
    %v2585 = vadd.f32 %v2584, %v2538
    %v2586 = vadd.f32 %v2585, %v2540
    %v2587 = vadd.f32 %v2586, %v2542
    %v2588 = vadd.f32 %v2587, %v2544
    %v2589 = vadd.f32 %v2588, %v2546
    %v2590 = vadd.f32 %v2589, %v2548
    %v2591 = vsel %vm925, %v2523, 0.0
    %v2592 = vsel %vm925, %v2525, 0.0
    %v2593 = vadd.f32 %v2591, %v2592
    %v2594 = vsel %vm925, %v2527, 0.0
    %v2595 = vadd.f32 %v2593, %v2594
    %v2596 = vsel %vm925, %v2529, 0.0
    %v2597 = vadd.f32 %v2595, %v2596
    %v2598 = vsel %vm925, %v2531, 0.0
    %v2599 = vadd.f32 %v2597, %v2598
    %v2600 = vsel %vm925, %v2533, 0.0
    %v2601 = vadd.f32 %v2599, %v2600
    %v2602 = vsel %vm925, %v2535, 0.0
    %v2603 = vadd.f32 %v2601, %v2602
    %v2604 = vsel %vm925, %v2537, 0.0
    %v2605 = vadd.f32 %v2603, %v2604
    %v2606 = vsel %vm925, %v2539, 0.0
    %v2607 = vadd.f32 %v2605, %v2606
    %v2608 = vsel %vm925, %v2541, 0.0
    %v2609 = vadd.f32 %v2607, %v2608
    %v2610 = vsel %vm925, %v2543, 0.0
    %v2611 = vadd.f32 %v2609, %v2610
    %v2612 = vsel %vm925, %v2545, 0.0
    %v2613 = vadd.f32 %v2611, %v2612
    %v2614 = vsel %vm925, %v2547, 0.0
    %v2615 = vadd.f32 %v2613, %v2614
    %v2616 = vsel %vm925, %v2549, 0.0
    %v2617 = vadd.f32 %v2615, %v2616
    %v2618 = vsel %vm925, %v2617, 0.0
    %v2619 = vadd.f32 %v2590, %v2618
    %v2620 = vrot.slane %v2619, 4
    %v2621 = vadd.f32 %v2619, %v2620
    %v2622 = vrot.slane %v2621, 2
    %v2623 = vadd.f32 %v2621, %v2622
    %v2624 = vrot.slane %v2623, 1
    %v2625 = vadd.f32 %v2623, %v2624
    %v2626 = vlaneseq
    %v2627 = vand.u32 %v2626, 127
    %v2628 = vstv %s43
    %v2629 = vadd.s32 %v2627, %v2628
    %vm2630 = vcmp.lt.s32.totalorder %v2629, 2
    %v2631 = vsel %vm2630, %v2625, 0.0
    %2632 = vst [vmem:[#allocation8] sm:$0xff] %v2631
    // Predicated region
    $region18: #{tpu_custom_call.1} parent=1 // pred_check
      _
    $region19: #{tpu_custom_call.1} parent=1 // pred_check_branch
      %2634 = sbr.rel (0) target = $region21
    $region20: #{tpu_custom_call.1} parent=1 // pred_region
      %s2636 = ssub.s32 3584, 3584
      %2637 = vsyncadd [#allocation4], %s2636
      %s2638 = sshll.u32 [#allocation7], 4
      %s2639 = int_to_ptr.vmem [resolvable:$true] %s2638
      %2644 = dma.vmem_to_hbm [thread:$0]  %s2639, 3584, %s2, [#allocation4], 128, 128, 8
    $region21: #{tpu_custom_call.1} parent=1 // pred_fallthru
      _
    // Predicated region
    $region22: #{tpu_custom_call.1} parent=1 // pred_check
      _
    $region23: #{tpu_custom_call.1} parent=1 // pred_check_branch
      %2646 = sbr.rel (0) target = $region25
    $region24: #{tpu_custom_call.1} parent=1 // pred_region
      %s2648 = ssub.s32 128, 128
      %2649 = vsyncadd [#allocation9], %s2648
      %s2651 = sshll.u32 [#allocation8], 4
      %s2652 = int_to_ptr.vmem [resolvable:$true] %s2651
      %2654 = dma.vmem_to_hbm [thread:$0]  %s2652, 128, %s3, [#allocation9]
    $region25: #{tpu_custom_call.1} parent=1 // pred_fallthru
      _
    // Predicated region
    $region26: #{tpu_custom_call.1} parent=1 // pred_check
      _
    $region27: #{tpu_custom_call.1} parent=1 // pred_check_branch
      %2656 = sbr.rel (0) target = $region29
    $region28: #{tpu_custom_call.1} parent=1 // pred_region
      %2657 = dma.done [#allocation4], 3584
    $region29: #{tpu_custom_call.1} parent=1 // pred_fallthru
      _
    // Predicated region
    $region30: #{tpu_custom_call.1} parent=1 // pred_check
      _
    $region31: #{tpu_custom_call.1} parent=1 // pred_check_branch
      %2659 = sbr.rel (0) target = $region33
    $region32: #{tpu_custom_call.1} parent=1 // pred_region
      %2660 = dma.done [#allocation9], 128
    $region33: #{tpu_custom_call.1} parent=1 // pred_fallthru
      _
    %2661 = vsyncpa [#allocation3], 1
    %2662 = vsyncpa [#allocation6], 1
    %2663 = vsyncpa [#allocation4], 1
    %2664 = vsyncpa [#allocation9], 1

</llo_original>
